<compile_context>
chip_gen: v5e
topology: v5e:2x2
jax: 0.10.0
libtpu: 0.0.40
codegen_flags: <defaults>
</compile_context>

<pallas_src>
import functools

import jax
import jax.numpy as jnp
from jax import lax
from jax.experimental import pallas as pl
from jax.experimental.pallas import tpu as pltpu


def _round_up(x: int, k: int) -> int:
    return (x + k - 1) // k * k


# ----------------------------- pass 1: scores -> beta -----------------------
def _scores_kernel(z_ref, w1_ref, b1_ref, w2_ref, beta_ref, acc_ref,
                   *, n_valid: int, needs_mask: bool, mxu_dtype):
    """Accumulate per-view sums of tanh(z @ W1 + b1); finalize beta = softmax."""
    i = pl.program_id(0)
    M, tn, D = z_ref.shape

    @pl.when(i == 0)
    def _init():
        acc_ref[...] = jnp.zeros_like(acc_ref)
        beta_ref[...] = jnp.zeros_like(beta_ref)

    # Fused matmul over all M views: (M*tn, D) @ (D, H) -> (M*tn, H) f32.
    z2 = z_ref[...].reshape(M * tn, D).astype(mxu_dtype)
    w1 = w1_ref[...].astype(mxu_dtype)
    h = jnp.tanh(
        jnp.dot(z2, w1, preferred_element_type=jnp.float32) + b1_ref[...]
    )

    if needs_mask:
        node = i * tn + lax.broadcasted_iota(jnp.int32, (tn, 1), 0)
        mask = node < n_valid                                  # (tn, 1)

    # Per-view node-sum (sublane reduce), accumulated across grid steps.
    for m in range(M):
        h_m = h[m * tn:(m + 1) * tn, :]                        # aligned slice
        if needs_mask:
            h_m = jnp.where(mask, h_m, 0.0)
        acc_ref[m:m + 1, :] += jnp.sum(h_m, axis=0, keepdims=True)

    @pl.when(i == pl.num_programs(0) - 1)
    def _finalize():
        h_mean = acc_ref[...] * (1.0 / n_valid)                # (M, H)
        # Width-1 GEMM replaced by a VPU multiply + lane reduce.
        scores = jnp.sum(h_mean * w2_ref[...], axis=1, keepdims=True)  # (M, 1)
        mx = jnp.max(scores, axis=0, keepdims=True)
        e = jnp.exp(scores - mx)
        beta_ref[...] = e / jnp.sum(e, axis=0, keepdims=True)


# ----------------------------- pass 2: apply beta ---------------------------
def _apply_kernel(beta_ref, z_ref, out_ref):
    beta = beta_ref[...]                                       # (M, 1) f32
    M = z_ref.shape[0]
    acc = beta[0:1, :] * z_ref[0].astype(jnp.float32)          # (tn, D)
    for m in range(1, M):
        acc = acc + beta[m:m + 1, :] * z_ref[m].astype(jnp.float32)
    out_ref[...] = acc.astype(out_ref.dtype)


# ----------------------------- wrapper ---------------------------------------
@functools.partial(jax.jit, static_argnames=("block_n", "mxu_dtype"))
def hybrid_attention(z, w1, b1, w2, *, block_n=512, mxu_dtype=jnp.bfloat16):
    """z: (N, M, D); w1: (D, H) (Linear1 weight^T); b1: (H,); w2: (H,) (Linear2
    weight, no bias). Returns (N, D)."""
    N, M, D = z.shape
    H = w1.shape[1]
    b1 = jnp.asarray(b1, jnp.float32).reshape(1, H)
    w2 = jnp.asarray(w2, jnp.float32).reshape(1, H)

    # Node-tile size: multiple of 32, bounded by a conservative VMEM budget so
    # the double-buffered z block fits comfortably on v5e/v6e/v7x defaults.
    bn = min(int(block_n), _round_up(N, 32))
    bn = max(32, (bn // 32) * 32)
    lane_d = _round_up(D, 128)                   # lane-padded VMEM footprint
    vmem_budget = 8 * 1024 * 1024
    while bn > 32 and 2 * M * bn * lane_d * 4 > vmem_budget:
        bn = max(32, ((bn // 2) // 32) * 32)
    n_pad = _round_up(N, bn)
    num_tiles = n_pad // bn
    needs_mask = n_pad != N

    # Relayout so every view is a contiguous, lane-dense (N, D) slab.
    # TODO(synk): in a full model, produce z directly as (M, N, D) upstream to
    # avoid this extra HBM pass.
    zt = jnp.transpose(z, (1, 0, 2))
    if needs_mask:
        zt = jnp.pad(zt, ((0, 0), (0, n_pad - N), (0, 0)))

    scores_kernel = functools.partial(
        _scores_kernel, n_valid=N, needs_mask=needs_mask, mxu_dtype=mxu_dtype)

    beta = pl.pallas_call(
        scores_kernel,
        out_shape=jax.ShapeDtypeStruct((M, 1), jnp.float32),
        grid_spec=pltpu.PrefetchScalarGridSpec(
            num_scalar_prefetch=0,
            grid=(num_tiles,),
            in_specs=[
                pl.BlockSpec((M, bn, D), lambda i: (0, i, 0)),   # z tile
                pl.BlockSpec((D, H), lambda i: (0, 0)),          # W1 (resident)
                pl.BlockSpec((1, H), lambda i: (0, 0)),          # b1
                pl.BlockSpec((1, H), lambda i: (0, 0)),          # w2 (as row)
            ],
            out_specs=pl.BlockSpec((M, 1), lambda i: (0, 0)),
            scratch_shapes=[pltpu.VMEM((M, H), jnp.float32)],
        ),
        compiler_params=pltpu.CompilerParams(
            dimension_semantics=("arbitrary",)),    # reduction over N tiles
    )(zt, w1, b1, w2)

    out_pad = pl.pallas_call(
        _apply_kernel,
        out_shape=jax.ShapeDtypeStruct((n_pad, D), z.dtype),
        grid_spec=pltpu.PrefetchScalarGridSpec(
            num_scalar_prefetch=0,
            grid=(num_tiles,),
            in_specs=[
                pl.BlockSpec((M, 1), lambda i: (0, 0)),          # beta (resident)
                pl.BlockSpec((M, bn, D), lambda i: (0, i, 0)),   # z tile
            ],
            out_specs=pl.BlockSpec((bn, D), lambda i: (i, 0)),
        ),
        compiler_params=pltpu.CompilerParams(
            dimension_semantics=("parallel",)),     # independent tiles / megacore
    )(beta, zt)

    return out_pad[:N] if needs_mask else out_pad


# ----------------------------- references ------------------------------------
def hybrid_attention_ref(z, w1, b1, w2):
    """Pure-JAX f32 reference mirroring the PyTorch module exactly."""
    w = jnp.tanh(z @ w1 + b1) @ w2[:, None]            # (N, M, 1)
    beta = jax.nn.softmax(w.mean(axis=0), axis=0)      # (M, 1)
    return (beta[None, :, :] * z).sum(axis=1)          # (N, D)


def hybrid_attention_matched_ref(z, w1, b1, w2, mxu_dtype=jnp.bfloat16):
    """Reference mirroring the kernel's bf16 MXU-operand casting (f32 elsewhere)."""
    h = jnp.tanh(jnp.dot(z.astype(mxu_dtype), w1.astype(mxu_dtype),
                         preferred_element_type=jnp.float32) + b1)   # (N,M,H) f32
    s = (h * w2).sum(-1).mean(0)                       # (M,)
    beta = jax.nn.softmax(s)                           # (M,)
    return (beta[None, :, None] * z).sum(axis=1)       # (N, D)


if __name__ == "__main__":
    # Small HAN-like shapes: N nodes, M metapaths, in_size, hidden_size.
    N, M, in_size, hidden_size = 200, 4, 32, 64

    key = jax.random.PRNGKey(0)
    k_z, k_w1, k_b1, k_w2 = jax.random.split(key, 4)
    z = jax.random.normal(k_z, (N, M, in_size), dtype=jnp.float32)
    w1 = jax.random.normal(k_w1, (in_size, hidden_size), jnp.float32) / in_size ** 0.5
    b1 = jax.random.normal(k_b1, (hidden_size,), jnp.float32) * 0.1
    w2 = jax.random.normal(k_w2, (hidden_size,), jnp.float32) / hidden_size ** 0.5

    ref = hybrid_attention_ref(z, w1, b1, w2)

    # (a) bf16 MXU operands, small tile -> exercises multi-tile accumulation and
    #     the padded-row masking path (N=200 is not a multiple of 64).
    out_bf16 = jax.block_until_ready(hybrid_attention(z, w1, b1, w2, block_n=64))
    assert out_bf16.shape == (N, in_size)
    matched = hybrid_attention_matched_ref(z, w1, b1, w2)
    assert jnp.allclose(out_bf16, matched, atol=1e-3, rtol=1e-3), (
        f"max diff vs matched ref {jnp.max(jnp.abs(out_bf16 - matched))}")
    assert jnp.allclose(out_bf16, ref, atol=5e-2, rtol=5e-2), (
        f"max diff vs f32 ref {jnp.max(jnp.abs(out_bf16 - ref))}")

    # (b) f32 MXU operands, default (single-tile) path.
    out_f32 = jax.block_until_ready(
        hybrid_attention(z, w1, b1, w2, mxu_dtype=jnp.float32))
    assert jnp.allclose(out_f32, ref, atol=5e-2, rtol=5e-2), (
        f"max diff {jnp.max(jnp.abs(out_f32 - ref))}")

    print("KERNEL_OK")
</pallas_src>

<mosaic_0001>
module attributes {stable_mosaic.version = 11 : i64} {
  func.func @_apply_kernel(%arg0: i32, %arg1: memref<4x1xf32, #tpu.memory_space<vmem>>, %arg2: memref<4x64x32xf32, #tpu.memory_space<vmem>>, %arg3: memref<64x32xf32, #tpu.memory_space<vmem>>) attributes {dimension_semantics = [#tpu.dimension_semantics<parallel>], iteration_bounds = array<i64: 4>, scalar_prefetch = 0 : i64, scratch_operands = 0 : i64, tpu.core_type = #tpu.core_type<tc>, window_params = [{pipeline_mode = #tpu.pipeline_mode<synchronous>, transform_indices = @transform_0, window_bounds = array<i64: 4, 1>}, {transform_indices = @transform_1, window_bounds = array<i64: 4, 64, 32>}, {transform_indices = @transform_2, window_bounds = array<i64: 64, 32>}]} {
    %c0 = arith.constant 0 : index
    %c0_0 = arith.constant 0 : index
    %0 = vector.load %arg1[%c0, %c0_0] : memref<4x1xf32, #tpu.memory_space<vmem>>, vector<4x1xf32>
    %1 = vector.extract_strided_slice %0 {offsets = [0, 0], sizes = [1, 1], strides = [1, 1]} : vector<4x1xf32> to vector<1x1xf32>
    %c0_1 = arith.constant 0 : index
    %c0_2 = arith.constant 0 : index
    %c0_3 = arith.constant 0 : index
    %2 = vector.load %arg2[%c0_1, %c0_2, %c0_3] : memref<4x64x32xf32, #tpu.memory_space<vmem>>, vector<1x64x32xf32>
    %3 = vector.shape_cast %2 : vector<1x64x32xf32> to vector<64x32xf32>
    %4 = vector.broadcast %1 : vector<1x1xf32> to vector<64x32xf32>
    %5 = arith.mulf %4, %3 : vector<64x32xf32>
    %6 = vector.extract_strided_slice %0 {offsets = [1, 0], sizes = [1, 1], strides = [1, 1]} : vector<4x1xf32> to vector<1x1xf32>
    %c1 = arith.constant 1 : index
    %c0_4 = arith.constant 0 : index
    %c0_5 = arith.constant 0 : index
    %7 = vector.load %arg2[%c1, %c0_4, %c0_5] : memref<4x64x32xf32, #tpu.memory_space<vmem>>, vector<1x64x32xf32>
    %8 = vector.shape_cast %7 : vector<1x64x32xf32> to vector<64x32xf32>
    %9 = vector.broadcast %6 : vector<1x1xf32> to vector<64x32xf32>
    %10 = arith.mulf %9, %8 : vector<64x32xf32>
    %11 = arith.addf %5, %10 : vector<64x32xf32>
    %12 = vector.extract_strided_slice %0 {offsets = [2, 0], sizes = [1, 1], strides = [1, 1]} : vector<4x1xf32> to vector<1x1xf32>
    %c2 = arith.constant 2 : index
    %c0_6 = arith.constant 0 : index
    %c0_7 = arith.constant 0 : index
    %13 = vector.load %arg2[%c2, %c0_6, %c0_7] : memref<4x64x32xf32, #tpu.memory_space<vmem>>, vector<1x64x32xf32>
    %14 = vector.shape_cast %13 : vector<1x64x32xf32> to vector<64x32xf32>
    %15 = vector.broadcast %12 : vector<1x1xf32> to vector<64x32xf32>
    %16 = arith.mulf %15, %14 : vector<64x32xf32>
    %17 = arith.addf %11, %16 : vector<64x32xf32>
    %18 = vector.extract_strided_slice %0 {offsets = [3, 0], sizes = [1, 1], strides = [1, 1]} : vector<4x1xf32> to vector<1x1xf32>
    %c3 = arith.constant 3 : index
    %c0_8 = arith.constant 0 : index
    %c0_9 = arith.constant 0 : index
    %19 = vector.load %arg2[%c3, %c0_8, %c0_9] : memref<4x64x32xf32, #tpu.memory_space<vmem>>, vector<1x64x32xf32>
    %20 = vector.shape_cast %19 : vector<1x64x32xf32> to vector<64x32xf32>
    %21 = vector.broadcast %18 : vector<1x1xf32> to vector<64x32xf32>
    %22 = arith.mulf %21, %20 : vector<64x32xf32>
    %23 = arith.addf %17, %22 : vector<64x32xf32>
    %c0_10 = arith.constant 0 : index
    %c0_11 = arith.constant 0 : index
    %24 = vector.load %arg3[%c0_10, %c0_11] : memref<64x32xf32, #tpu.memory_space<vmem>>, vector<64x32xf32>
    tpu.vector_store %arg3[%c0_10, %c0_11], %23 {strides = array<i32>} : memref<64x32xf32, #tpu.memory_space<vmem>>, vector<64x32xf32>,
    return
  }
  func.func @transform_0(%arg0: i32) -> (i32, i32) {
    %c0_i32 = arith.constant 0 : i32
    %c0_i32_0 = arith.constant 0 : i32
    %c0_i32_1 = arith.constant 0 : i32
    return %c0_i32, %c0_i32_0 : i32, i32
  }
  func.func @transform_1(%arg0: i32) -> (i32, i32, i32) {
    %c0_i32 = arith.constant 0 : i32
    %c0_i32_0 = arith.constant 0 : i32
    %c0_i32_1 = arith.constant 0 : i32
    return %c0_i32, %arg0, %c0_i32_0 : i32, i32, i32
  }
  func.func @transform_2(%arg0: i32) -> (i32, i32) {
    %c0_i32 = arith.constant 0 : i32
    %c0_i32_0 = arith.constant 0 : i32
    return %arg0, %c0_i32 : i32, i32
  }
}

module attributes {stable_mosaic.version = 11 : i64} {
  func.func @_scores_kernel(%arg0: i32, %arg1: memref<4x64x32xf32, #tpu.memory_space<vmem>>, %arg2: memref<32x64xf32, #tpu.memory_space<vmem>>, %arg3: memref<1x64xf32, #tpu.memory_space<vmem>>, %arg4: memref<1x64xf32, #tpu.memory_space<vmem>>, %arg5: memref<4x1xf32, #tpu.memory_space<vmem>>, %arg6: memref<4x64xf32, #tpu.memory_space<vmem>>) attributes {dimension_semantics = [#tpu.dimension_semantics<arbitrary>], iteration_bounds = array<i64: 4>, scalar_prefetch = 0 : i64, scratch_operands = 1 : i64, tpu.core_type = #tpu.core_type<tc>, window_params = [{transform_indices = @transform_0, window_bounds = array<i64: 4, 64, 32>}, {pipeline_mode = #tpu.pipeline_mode<synchronous>, transform_indices = @transform_1, window_bounds = array<i64: 32, 64>}, {pipeline_mode = #tpu.pipeline_mode<synchronous>, transform_indices = @transform_2, window_bounds = array<i64: 1, 64>}, {pipeline_mode = #tpu.pipeline_mode<synchronous>, transform_indices = @transform_3, window_bounds = array<i64: 1, 64>}, {pipeline_mode = #tpu.pipeline_mode<synchronous>, transform_indices = @transform_4, window_bounds = array<i64: 4, 1>}]} {
    %c0_i32 = arith.constant 0 : i32
    %0 = arith.cmpi eq, %arg0, %c0_i32 : i32
    %1 = arith.extui %0 : i1 to i32
    %c0_i32_0 = arith.constant 0 : i32
    %2 = arith.cmpi ne, %1, %c0_i32_0 : i32
    scf.if %2 {
      %cst_29 = arith.constant 0.000000e+00 : f32
      %62 = vector.broadcast %cst_29 : f32 to vector<4x64xf32>
      %c0_30 = arith.constant 0 : index
      %c0_31 = arith.constant 0 : index
      %63 = vector.load %arg6[%c0_30, %c0_31] : memref<4x64xf32, #tpu.memory_space<vmem>>, vector<4x64xf32>
      tpu.vector_store %arg6[%c0_30, %c0_31], %62 {strides = array<i32>} : memref<4x64xf32, #tpu.memory_space<vmem>>, vector<4x64xf32>,
      %cst_32 = arith.constant 0.000000e+00 : f32
      %64 = vector.broadcast %cst_32 : f32 to vector<4x1xf32>
      %c0_33 = arith.constant 0 : index
      %c0_34 = arith.constant 0 : index
      %65 = vector.load %arg5[%c0_33, %c0_34] : memref<4x1xf32, #tpu.memory_space<vmem>>, vector<4x1xf32>
      tpu.vector_store %arg5[%c0_33, %c0_34], %64 {strides = array<i32>} : memref<4x1xf32, #tpu.memory_space<vmem>>, vector<4x1xf32>,
    } else {
    }
    %c0 = arith.constant 0 : index
    %c0_1 = arith.constant 0 : index
    %c0_2 = arith.constant 0 : index
    %3 = vector.load %arg1[%c0, %c0_1, %c0_2] : memref<4x64x32xf32, #tpu.memory_space<vmem>>, vector<4x64x32xf32>
    %4 = vector.shape_cast %3 : vector<4x64x32xf32> to vector<256x32xf32>
    %5 = arith.truncf %4 : vector<256x32xf32> to vector<256x32xbf16>
    %c0_3 = arith.constant 0 : index
    %c0_4 = arith.constant 0 : index
    %6 = vector.load %arg2[%c0_3, %c0_4] : memref<32x64xf32, #tpu.memory_space<vmem>>, vector<32x64xf32>
    %7 = arith.truncf %6 : vector<32x64xf32> to vector<32x64xbf16>
    %cst = arith.constant dense<0.000000e+00> : vector<256x64xf32>
    %8 = tpu.matmul %5, %7, %cst {dimension_numbers = #tpu.dot_dimension_numbers<[1], [0], [0], [1], [0, 0, 1, 1], [], []>} : vector<256x32xbf16>, vector<32x64xbf16>, vector<256x64xf32> -> vector<256x64xf32>
    %c0_5 = arith.constant 0 : index
    %c0_6 = arith.constant 0 : index
    %9 = vector.load %arg3[%c0_5, %c0_6] : memref<1x64xf32, #tpu.memory_space<vmem>>, vector<1x64xf32>
    %10 = vector.broadcast %9 : vector<1x64xf32> to vector<256x64xf32>
    %11 = arith.addf %8, %10 : vector<256x64xf32>
    %12 = math.tanh %11 : vector<256x64xf32>
    %c64_i32 = arith.constant 64 : i32
    %13 = arith.muli %arg0, %c64_i32 : i32
    %14 = tpu.iota {dimensions = array<i32: 0>} : vector<64x1xi32>
    %15 = vector.broadcast %13 : i32 to vector<64x1xi32>
    %16 = arith.addi %15, %14 : vector<64x1xi32>
    %c200_i32 = arith.constant 200 : i32
    %17 = vector.broadcast %c200_i32 : i32 to vector<64x1xi32>
    %18 = arith.cmpi slt, %16, %17 : vector<64x1xi32>
    %19 = vector.extract_strided_slice %12 {offsets = [0, 0], sizes = [64, 64], strides = [1, 1]} : vector<256x64xf32> to vector<64x64xf32>
    %cst_7 = arith.constant 0.000000e+00 : f32
    %20 = vector.shape_cast %18 : vector<64x1xi1> to vector<64x1xi1>
    %21 = vector.broadcast %20 : vector<64x1xi1> to vector<64x64xi1>
    %22 = vector.broadcast %cst_7 : f32 to vector<64x64xf32>
    %23 = arith.select %21, %19, %22 : vector<64x64xi1>, vector<64x64xf32>
    %c0_8 = arith.constant 0 : index
    %c0_9 = arith.constant 0 : index
    %24 = vector.load %arg6[%c0_8, %c0_9] : memref<4x64xf32, #tpu.memory_space<vmem>>, vector<1x64xf32>
    %cst_10 = arith.constant dense<0.000000e+00> : vector<64xf32>
    %25 = vector.multi_reduction <add>, %23, %cst_10 [0] : vector<64x64xf32> to vector<64xf32>
    %26 = vector.shape_cast %25 : vector<64xf32> to vector<1x64xf32>
    %27 = arith.addf %24, %26 : vector<1x64xf32>
    %c0_11 = arith.constant 0 : index
    %c0_12 = arith.constant 0 : index
    %28 = vector.load %arg6[%c0_11, %c0_12] : memref<4x64xf32, #tpu.memory_space<vmem>>, vector<1x64xf32>
    tpu.vector_store %arg6[%c0_11, %c0_12], %27 {strides = array<i32>} : memref<4x64xf32, #tpu.memory_space<vmem>>, vector<1x64xf32>,
    %29 = vector.extract_strided_slice %12 {offsets = [64, 0], sizes = [64, 64], strides = [1, 1]} : vector<256x64xf32> to vector<64x64xf32>
    %cst_13 = arith.constant 0.000000e+00 : f32
    %30 = vector.shape_cast %18 : vector<64x1xi1> to vector<64x1xi1>
    %31 = vector.broadcast %30 : vector<64x1xi1> to vector<64x64xi1>
    %32 = vector.broadcast %cst_13 : f32 to vector<64x64xf32>
    %33 = arith.select %31, %29, %32 : vector<64x64xi1>, vector<64x64xf32>
    %c1 = arith.constant 1 : index
    %c0_14 = arith.constant 0 : index
    %34 = vector.load %arg6[%c1, %c0_14] : memref<4x64xf32, #tpu.memory_space<vmem>>, vector<1x64xf32>
    %cst_15 = arith.constant dense<0.000000e+00> : vector<64xf32>
    %35 = vector.multi_reduction <add>, %33, %cst_15 [0] : vector<64x64xf32> to vector<64xf32>
    %36 = vector.shape_cast %35 : vector<64xf32> to vector<1x64xf32>
    %37 = arith.addf %34, %36 : vector<1x64xf32>
    %c1_16 = arith.constant 1 : index
    %c0_17 = arith.constant 0 : index
    %38 = vector.load %arg6[%c1_16, %c0_17] : memref<4x64xf32, #tpu.memory_space<vmem>>, vector<1x64xf32>
    tpu.vector_store %arg6[%c1_16, %c0_17], %37 {strides = array<i32>} : memref<4x64xf32, #tpu.memory_space<vmem>>, vector<1x64xf32>,
    %39 = vector.extract_strided_slice %12 {offsets = [128, 0], sizes = [64, 64], strides = [1, 1]} : vector<256x64xf32> to vector<64x64xf32>
    %cst_18 = arith.constant 0.000000e+00 : f32
    %40 = vector.shape_cast %18 : vector<64x1xi1> to vector<64x1xi1>
    %41 = vector.broadcast %40 : vector<64x1xi1> to vector<64x64xi1>
    %42 = vector.broadcast %cst_18 : f32 to vector<64x64xf32>
    %43 = arith.select %41, %39, %42 : vector<64x64xi1>, vector<64x64xf32>
    %c2 = arith.constant 2 : index
    %c0_19 = arith.constant 0 : index
    %44 = vector.load %arg6[%c2, %c0_19] : memref<4x64xf32, #tpu.memory_space<vmem>>, vector<1x64xf32>
    %cst_20 = arith.constant dense<0.000000e+00> : vector<64xf32>
    %45 = vector.multi_reduction <add>, %43, %cst_20 [0] : vector<64x64xf32> to vector<64xf32>
    %46 = vector.shape_cast %45 : vector<64xf32> to vector<1x64xf32>
    %47 = arith.addf %44, %46 : vector<1x64xf32>
    %c2_21 = arith.constant 2 : index
    %c0_22 = arith.constant 0 : index
    %48 = vector.load %arg6[%c2_21, %c0_22] : memref<4x64xf32, #tpu.memory_space<vmem>>, vector<1x64xf32>
    tpu.vector_store %arg6[%c2_21, %c0_22], %47 {strides = array<i32>} : memref<4x64xf32, #tpu.memory_space<vmem>>, vector<1x64xf32>,
    %49 = vector.extract_strided_slice %12 {offsets = [192, 0], sizes = [64, 64], strides = [1, 1]} : vector<256x64xf32> to vector<64x64xf32>
    %cst_23 = arith.constant 0.000000e+00 : f32
    %50 = vector.shape_cast %18 : vector<64x1xi1> to vector<64x1xi1>
    %51 = vector.broadcast %50 : vector<64x1xi1> to vector<64x64xi1>
    %52 = vector.broadcast %cst_23 : f32 to vector<64x64xf32>
    %53 = arith.select %51, %49, %52 : vector<64x64xi1>, vector<64x64xf32>
    %c3 = arith.constant 3 : index
    %c0_24 = arith.constant 0 : index
    %54 = vector.load %arg6[%c3, %c0_24] : memref<4x64xf32, #tpu.memory_space<vmem>>, vector<1x64xf32>
    %cst_25 = arith.constant dense<0.000000e+00> : vector<64xf32>
    %55 = vector.multi_reduction <add>, %53, %cst_25 [0] : vector<64x64xf32> to vector<64xf32>
    %56 = vector.shape_cast %55 : vector<64xf32> to vector<1x64xf32>
    %57 = arith.addf %54, %56 : vector<1x64xf32>
    %c3_26 = arith.constant 3 : index
    %c0_27 = arith.constant 0 : index
    %58 = vector.load %arg6[%c3_26, %c0_27] : memref<4x64xf32, #tpu.memory_space<vmem>>, vector<1x64xf32>
    tpu.vector_store %arg6[%c3_26, %c0_27], %57 {strides = array<i32>} : memref<4x64xf32, #tpu.memory_space<vmem>>, vector<1x64xf32>,
    %c3_i32 = arith.constant 3 : i32
    %59 = arith.cmpi eq, %arg0, %c3_i32 : i32
    %60 = arith.extui %59 : i1 to i32
    %c0_i32_28 = arith.constant 0 : i32
    %61 = arith.cmpi ne, %60, %c0_i32_28 : i32
    scf.if %61 {
      %c0_29 = arith.constant 0 : index
      %c0_30 = arith.constant 0 : index
      %62 = vector.load %arg6[%c0_29, %c0_30] : memref<4x64xf32, #tpu.memory_space<vmem>>, vector<4x64xf32>
      %cst_31 = arith.constant 5.000000e-03 : f32
      %63 = vector.broadcast %cst_31 : f32 to vector<4x64xf32>
      %64 = arith.mulf %62, %63 : vector<4x64xf32>
      %c0_32 = arith.constant 0 : index
      %c0_33 = arith.constant 0 : index
      %65 = vector.load %arg4[%c0_32, %c0_33] : memref<1x64xf32, #tpu.memory_space<vmem>>, vector<1x64xf32>
      %66 = vector.broadcast %65 : vector<1x64xf32> to vector<4x64xf32>
      %67 = arith.mulf %64, %66 : vector<4x64xf32>
      %cst_34 = arith.constant dense<0.000000e+00> : vector<4xf32>
      %68 = vector.multi_reduction <add>, %67, %cst_34 [1] : vector<4x64xf32> to vector<4xf32>
      %69 = vector.shape_cast %68 : vector<4xf32> to vector<4x1xf32>
      %cst_35 = arith.constant dense<0xFF800000> : vector<1xf32>
      %70 = vector.multi_reduction <maximumf>, %69, %cst_35 [0] : vector<4x1xf32> to vector<1xf32>
      %71 = vector.shape_cast %70 : vector<1xf32> to vector<1x1xf32>
      %72 = vector.broadcast %71 : vector<1x1xf32> to vector<4x1xf32>
      %73 = arith.subf %69, %72 : vector<4x1xf32>
      %74 = math.exp %73 : vector<4x1xf32>
      %cst_36 = arith.constant dense<0.000000e+00> : vector<1xf32>
      %75 = vector.multi_reduction <add>, %74, %cst_36 [0] : vector<4x1xf32> to vector<1xf32>
      %76 = vector.shape_cast %75 : vector<1xf32> to vector<1x1xf32>
      %77 = vector.broadcast %76 : vector<1x1xf32> to vector<4x1xf32>
      %78 = arith.divf %74, %77 : vector<4x1xf32>
      %c0_37 = arith.constant 0 : index
      %c0_38 = arith.constant 0 : index
      %79 = vector.load %arg5[%c0_37, %c0_38] : memref<4x1xf32, #tpu.memory_space<vmem>>, vector<4x1xf32>
      tpu.vector_store %arg5[%c0_37, %c0_38], %78 {strides = array<i32>} : memref<4x1xf32, #tpu.memory_space<vmem>>, vector<4x1xf32>,
    } else {
    }
    return
  }
  func.func @transform_0(%arg0: i32) -> (i32, i32, i32) {
    %c0_i32 = arith.constant 0 : i32
    %c0_i32_0 = arith.constant 0 : i32
    %c0_i32_1 = arith.constant 0 : i32
    return %c0_i32, %arg0, %c0_i32_0 : i32, i32, i32
  }
  func.func @transform_1(%arg0: i32) -> (i32, i32) {
    %c0_i32 = arith.constant 0 : i32
    %c0_i32_0 = arith.constant 0 : i32
    %c0_i32_1 = arith.constant 0 : i32
    return %c0_i32, %c0_i32_0 : i32, i32
  }
  func.func @transform_2(%arg0: i32) -> (i32, i32) {
    %c0_i32 = arith.constant 0 : i32
    %c0_i32_0 = arith.constant 0 : i32
    %c0_i32_1 = arith.constant 0 : i32
    return %c0_i32, %c0_i32_0 : i32, i32
  }
  func.func @transform_3(%arg0: i32) -> (i32, i32) {
    %c0_i32 = arith.constant 0 : i32
    %c0_i32_0 = arith.constant 0 : i32
    %c0_i32_1 = arith.constant 0 : i32
    return %c0_i32, %c0_i32_0 : i32, i32
  }
  func.func @transform_4(%arg0: i32) -> (i32, i32) {
    %c0_i32 = arith.constant 0 : i32
    %c0_i32_0 = arith.constant 0 : i32
    %c0_i32_1 = arith.constant 0 : i32
    return %c0_i32, %c0_i32_0 : i32, i32
  }
}

</mosaic_0001>

<llo_original>
// kernel: hybrid_attention.3
$region0: #{hybrid_attention.3}
  #allocation0 [shape = 'u32[]', space=smem, size = 0x4, offset = 0x4, fixed_abs, tag = 'smem constant byte address 0x4 - core index']
  #allocation1 [shape = 'u32[72,128]{1,0:T(1,128)}', space=vmem, size = 0x9000, scoped, tag = 'internal scratch']
  %s0 = inlined_call_operand.vmem [shape: f32[4,1], index: 0, kind: input, shape index: {}]
  %s1 = inlined_call_operand.vmem [shape: f32[4,256,32], index: 1, kind: input, shape index: {}]
  %s2 = inlined_call_operand.vmem [shape: f32[256,32], index: 2, kind: output, shape index: {}]
  %s3 = sld [smem:[#allocation0]]
  $region79: #{hybrid_attention.3} parent=0
    _
  %s5 = ssub.s32 1, %s3
  %s6 = scalar_select 0, %s5, %s3
  $region1: #{hybrid_attention.3} parent=0
    #allocation2 [shape = 'u8[262144]{0}', space=vmem, size = 0x40000, scoped, tag = 'input window, operand 1']
    loop: start=0, step=1, limit=6
    $region2: #{hybrid_attention.3} parent=1 // loop_pre_header
      _
    $region3: #{hybrid_attention.3} parent=1 // loop_header
      %s8 = sphi 0, %s12
      %p9 = scmp.ge.s32.totalorder %s8, 6
      %s16 = sphi 0, %s16
      %s18 = sphi 0, %s16
      %s19 = sphi 0, %s18
      %s33 = sphi 0, %s19
      %s39 = sphi 0, %s41
      %s42 = sphi 0, %s39
      %s43 = sphi 0, %s42
      %s59 = sphi 0, %s43
      %s65 = sphi 0, %s67
      %s68 = sphi 0, %s65
      %s69 = sphi 0, %s68
      %s85 = sphi 0, %s69
    $region4: #{hybrid_attention.3} parent=1 // loop_header_branch
      %11 = sbr.rel (%p9) target = $region8
    $region5: #{hybrid_attention.3} parent=1 // loop_body
      %s13 = ssub.s32 %s8, 1
      %s14 = ssub.s32 %s8, 2
      %s15 = sadd.s32 %s8, 1
      %s17 = sadd.s32 %s16, 1
      %p20 = scmp.eq.s32.totalorder %s8, 3
      %p21 = scmp.ne.s32.totalorder %s16, %s18
      %p22 = scmp.eq.s32.totalorder %s8, 0
      %p23 = por %p21, %p22
      %p24 = scmp.ne.s32.totalorder %s16, %s18
      %p25 = scmp.eq.s32.totalorder %s13, 3
      %p26 = por %p24, %p25
      %p27 = scmp.ne.s32.totalorder %s18, %s19
      %p28 = scmp.eq.s32.totalorder %s13, 0
      %p29 = por %p27, %p28
      %p30 = scmp.ne.s32.totalorder %s18, %s19
      %p31 = scmp.eq.s32.totalorder %s14, 3
      %p32 = por %p30, %p31
      %p34 = scmp.ne.s32.totalorder %s19, %s33
      %p35 = scmp.eq.s32.totalorder %s14, 0
      %p36 = por %p34, %p35
      %s37 = ssub.s32 %s8, %s15
      %p38 = scmp.eq.s32.totalorder %s37, 0
      %s40 = sadd.s32 %s39, 1
      %s41 = scalar_select %p38, %s39, %s40
      %p44 = pneg %p38
      %p45 = scmp.eq.s32.totalorder %s8, 3
      %p46 = por %p44, %p45
      %p47 = scmp.ne.s32.totalorder %s39, %s42
      %p48 = scmp.eq.s32.totalorder %s8, 0
      %p49 = por %p47, %p48
      %p50 = scmp.ne.s32.totalorder %s39, %s42
      %p51 = scmp.eq.s32.totalorder %s13, 3
      %p52 = por %p50, %p51
      %p53 = scmp.ne.s32.totalorder %s42, %s43
      %p54 = scmp.eq.s32.totalorder %s13, 0
      %p55 = por %p53, %p54
      %p56 = scmp.ne.s32.totalorder %s42, %s43
      %p57 = scmp.eq.s32.totalorder %s14, 3
      %p58 = por %p56, %p57
      %p60 = scmp.ne.s32.totalorder %s43, %s59
      %p61 = scmp.eq.s32.totalorder %s14, 0
      %p62 = por %p60, %p61
      %s63 = ssub.s32 %s8, %s15
      %p64 = scmp.eq.s32.totalorder %s63, 0
      %s66 = sadd.s32 %s65, 1
      %s67 = scalar_select %p64, %s65, %s66
      %p70 = pneg %p64
      %p71 = scmp.eq.s32.totalorder %s8, 3
      %p72 = por %p70, %p71
      %p73 = scmp.ne.s32.totalorder %s65, %s68
      %p74 = scmp.eq.s32.totalorder %s8, 0
      %p75 = por %p73, %p74
      %p76 = scmp.ne.s32.totalorder %s65, %s68
      %p77 = scmp.eq.s32.totalorder %s13, 3
      %p78 = por %p76, %p77
      %p79 = scmp.ne.s32.totalorder %s68, %s69
      %p80 = scmp.eq.s32.totalorder %s13, 0
      %p81 = por %p79, %p80
      %p82 = scmp.ne.s32.totalorder %s68, %s69
      %p83 = scmp.eq.s32.totalorder %s14, 3
      %p84 = por %p82, %p83
      %p86 = scmp.ne.s32.totalorder %s69, %s85
      %p87 = scmp.eq.s32.totalorder %s14, 0
      %p88 = por %p86, %p87
      %p89 = scmp.le.s32.totalorder 1, %s8
      %p90 = scmp.lt.s32.totalorder %s8, 5
      %p91 = pnand %p89, %p90
      %p92 = pneg %p91
      // Predicated region
      $region9: #{hybrid_attention.3} parent=5 // pred_check
        _
      $region10: #{hybrid_attention.3} parent=5 // pred_check_branch
        %94 = sbr.rel (%p91) target = $region12
      $region11: #{hybrid_attention.3} parent=5 // pred_region
        %s95 = ssub.s32 %s8, 1
        // Predicated region
        $region13: #{hybrid_attention.3} parent=11 // pred_check
          %p96 = pneg %p29
        $region14: #{hybrid_attention.3} parent=11 // pred_check_branch
          %98 = sbr.rel (%p96) target = $region16
        $region15: #{hybrid_attention.3} parent=11 // pred_region
          _
        $region16: #{hybrid_attention.3} parent=11 // pred_fallthru
          _
      $region12: #{hybrid_attention.3} parent=5 // pred_fallthru
        _
      %p99 = scmp.lt.s32.totalorder %s8, 4
      // Predicated region
      $region17: #{hybrid_attention.3} parent=5 // pred_check
        %p100 = pneg %p99
      $region18: #{hybrid_attention.3} parent=5 // pred_check_branch
        %102 = sbr.rel (%p100) target = $region20
      $region19: #{hybrid_attention.3} parent=5 // pred_region
        // Predicated region
        $region21: #{hybrid_attention.3} parent=19 // pred_check
          %p103 = pneg %p49
        $region22: #{hybrid_attention.3} parent=19 // pred_check_branch
          %105 = sbr.rel (%p103) target = $region24
        $region23: #{hybrid_attention.3} parent=19 // pred_region
          %s106 = sand.u32 %s39, 1
          %s107 = sand.u32 %s39, 1
          %s108 = smul.addr %s107, 256
          %s109 = scalar_lea.vmem [#allocation2], %s108
          %s110 = smul.u32 8, %s8
          %s111 = smul.addr %s110, 8
          %s112 = scalar_lea.vmem %s1, %s111
          // Predicated region
          $region25: #{hybrid_attention.3} parent=23 // pred_check
            _
          $region26: #{hybrid_attention.3} parent=23 // pred_check_branch
            %114 = sbr.rel (0) target = $region28
          $region27: #{hybrid_attention.3} parent=23 // pred_region
            // Predicated region
            $region29: #{hybrid_attention.3} parent=27 // pred_check
              _
            $region30: #{hybrid_attention.3} parent=27 // pred_check_branch
              %116 = sbr.rel (0) target = $region32
            $region31: #{hybrid_attention.3} parent=27 // pred_region
              // Predicated region
              $region44: #{hybrid_attention.3} parent=31 // pred_check
                _
              $region45: #{hybrid_attention.3} parent=31 // pred_check_branch
                %194 = sbr.rel (0) target = $region47
              $region46: #{hybrid_attention.3} parent=31 // pred_region
                loop: start=0, step=1, limit=1
                $region48: #{hybrid_attention.3} parent=46 // loop_pre_header
                  _
                $region49: #{hybrid_attention.3} parent=46 // loop_header
                  %s196 = sphi 0, %s200
                  %p197 = scmp.ge.s32.totalorder %s196, 1
                  %s201 = sphi %s112, %s112
                  %s202 = sphi %s109, %s109
                $region50: #{hybrid_attention.3} parent=46 // loop_header_branch
                  %199 = sbr.rel (%p197) target = $region54
                $region51: #{hybrid_attention.3} parent=46 // loop_body
                  %v203 = vld [vmem:[%s201] sm:$0xff]
                  %204 = vst [vmem:[%s202] sm:$0xff] %v203
                  %v205 = vld [vmem:[%s201 + $0x8] sm:$0xff]
                  %206 = vst [vmem:[%s202 + $0x8] sm:$0xff] %v205
                  %v207 = vld [vmem:[%s201 + $0x10] sm:$0xff]
                  %208 = vst [vmem:[%s202 + $0x10] sm:$0xff] %v207
                  %v209 = vld [vmem:[%s201 + $0x18] sm:$0xff]
                  %210 = vst [vmem:[%s202 + $0x18] sm:$0xff] %v209
                  %v211 = vld [vmem:[%s201 + $0x20] sm:$0xff]
                  %212 = vst [vmem:[%s202 + $0x20] sm:$0xff] %v211
                  %v213 = vld [vmem:[%s201 + $0x28] sm:$0xff]
                  %214 = vst [vmem:[%s202 + $0x28] sm:$0xff] %v213
                  %v215 = vld [vmem:[%s201 + $0x30] sm:$0xff]
                  %216 = vst [vmem:[%s202 + $0x30] sm:$0xff] %v215
                  %v217 = vld [vmem:[%s201 + $0x38] sm:$0xff]
                  %218 = vst [vmem:[%s202 + $0x38] sm:$0xff] %v217
                  %v219 = vld [vmem:[%s201 + $0x100] sm:$0xff]
                  %220 = vst [vmem:[%s202 + $0x40] sm:$0xff] %v219
                  %v221 = vld [vmem:[%s201 + $0x108] sm:$0xff]
                  %222 = vst [vmem:[%s202 + $0x48] sm:$0xff] %v221
                  %v223 = vld [vmem:[%s201 + $0x110] sm:$0xff]
                  %224 = vst [vmem:[%s202 + $0x50] sm:$0xff] %v223
                  %v225 = vld [vmem:[%s201 + $0x118] sm:$0xff]
                  %226 = vst [vmem:[%s202 + $0x58] sm:$0xff] %v225
                  %v227 = vld [vmem:[%s201 + $0x120] sm:$0xff]
                  %228 = vst [vmem:[%s202 + $0x60] sm:$0xff] %v227
                  %v229 = vld [vmem:[%s201 + $0x128] sm:$0xff]
                  %230 = vst [vmem:[%s202 + $0x68] sm:$0xff] %v229
                  %v231 = vld [vmem:[%s201 + $0x130] sm:$0xff]
                  %232 = vst [vmem:[%s202 + $0x70] sm:$0xff] %v231
                  %v233 = vld [vmem:[%s201 + $0x138] sm:$0xff]
                  %234 = vst [vmem:[%s202 + $0x78] sm:$0xff] %v233
                  %v235 = vld [vmem:[%s201 + $0x200] sm:$0xff]
                  %236 = vst [vmem:[%s202 + $0x80] sm:$0xff] %v235
                  %v237 = vld [vmem:[%s201 + $0x208] sm:$0xff]
                  %238 = vst [vmem:[%s202 + $0x88] sm:$0xff] %v237
                  %v239 = vld [vmem:[%s201 + $0x210] sm:$0xff]
                  %240 = vst [vmem:[%s202 + $0x90] sm:$0xff] %v239
                  %v241 = vld [vmem:[%s201 + $0x218] sm:$0xff]
                  %242 = vst [vmem:[%s202 + $0x98] sm:$0xff] %v241
                  %v243 = vld [vmem:[%s201 + $0x220] sm:$0xff]
                  %244 = vst [vmem:[%s202 + $0xa0] sm:$0xff] %v243
                  %v245 = vld [vmem:[%s201 + $0x228] sm:$0xff]
                  %246 = vst [vmem:[%s202 + $0xa8] sm:$0xff] %v245
                  %v247 = vld [vmem:[%s201 + $0x230] sm:$0xff]
                  %248 = vst [vmem:[%s202 + $0xb0] sm:$0xff] %v247
                  %v249 = vld [vmem:[%s201 + $0x238] sm:$0xff]
                  %250 = vst [vmem:[%s202 + $0xb8] sm:$0xff] %v249
                  %v251 = vld [vmem:[%s201 + $0x300] sm:$0xff]
                  %252 = vst [vmem:[%s202 + $0xc0] sm:$0xff] %v251
                  %v253 = vld [vmem:[%s201 + $0x308] sm:$0xff]
                  %254 = vst [vmem:[%s202 + $0xc8] sm:$0xff] %v253
                  %v255 = vld [vmem:[%s201 + $0x310] sm:$0xff]
                  %256 = vst [vmem:[%s202 + $0xd0] sm:$0xff] %v255
                  %v257 = vld [vmem:[%s201 + $0x318] sm:$0xff]
                  %258 = vst [vmem:[%s202 + $0xd8] sm:$0xff] %v257
                  %v259 = vld [vmem:[%s201 + $0x320] sm:$0xff]
                  %260 = vst [vmem:[%s202 + $0xe0] sm:$0xff] %v259
                  %v261 = vld [vmem:[%s201 + $0x328] sm:$0xff]
                  %262 = vst [vmem:[%s202 + $0xe8] sm:$0xff] %v261
                  %v263 = vld [vmem:[%s201 + $0x330] sm:$0xff]
                  %264 = vst [vmem:[%s202 + $0xf0] sm:$0xff] %v263
                  %v265 = vld [vmem:[%s201 + $0x338] sm:$0xff]
                  %266 = vst [vmem:[%s202 + $0xf8] sm:$0xff] %v265
                $region52: #{hybrid_attention.3} parent=46 // loop_footer
                  %s200 = sadd.s32 1, %s196
                $region53: #{hybrid_attention.3} parent=46 // loop_footer_branch
                  %195 = sbr.rel target = $region49
                $region54: #{hybrid_attention.3} parent=46 // loop_exit
                  _
              $region47: #{hybrid_attention.3} parent=31 // pred_fallthru
                _
              // Predicated region
              $region55: #{hybrid_attention.3} parent=31 // pred_check
                _
              $region56: #{hybrid_attention.3} parent=31 // pred_check_branch
                %268 = sbr.rel target = $region58
              $region57: #{hybrid_attention.3} parent=31 // pred_region
                _
              $region58: #{hybrid_attention.3} parent=31 // pred_fallthru
                _
            $region32: #{hybrid_attention.3} parent=27 // pred_fallthru
              _
            // Predicated region
            $region33: #{hybrid_attention.3} parent=27 // pred_check
              _
            $region34: #{hybrid_attention.3} parent=27 // pred_check_branch
              %118 = sbr.rel target = $region36
            $region35: #{hybrid_attention.3} parent=27 // pred_region
              %s120 = ssub.s32 256, 1
              loop: start=0, step=1, limit=1
              $region37: #{hybrid_attention.3} parent=35 // loop_pre_header
                _
              $region38: #{hybrid_attention.3} parent=35 // loop_header
                %s122 = sphi 0, %s126
                %p123 = scmp.ge.s32.totalorder %s122, 1
                %s127 = sphi %s112, %s112
                %s128 = sphi %s109, %s109
              $region39: #{hybrid_attention.3} parent=35 // loop_header_branch
                %125 = sbr.rel (%p123) target = $region43
              $region40: #{hybrid_attention.3} parent=35 // loop_body
                %v129 = vld [vmem:[%s127] sm:%s120]
                %130 = vst [vmem:[%s128] sm:%s120] %v129
                %v131 = vld [vmem:[%s127 + $0x8] sm:%s120]
                %132 = vst [vmem:[%s128 + $0x8] sm:%s120] %v131
                %v133 = vld [vmem:[%s127 + $0x10] sm:%s120]
                %134 = vst [vmem:[%s128 + $0x10] sm:%s120] %v133
                %v135 = vld [vmem:[%s127 + $0x18] sm:%s120]
                %136 = vst [vmem:[%s128 + $0x18] sm:%s120] %v135
                %v137 = vld [vmem:[%s127 + $0x20] sm:%s120]
                %138 = vst [vmem:[%s128 + $0x20] sm:%s120] %v137
                %v139 = vld [vmem:[%s127 + $0x28] sm:%s120]
                %140 = vst [vmem:[%s128 + $0x28] sm:%s120] %v139
                %v141 = vld [vmem:[%s127 + $0x30] sm:%s120]
                %142 = vst [vmem:[%s128 + $0x30] sm:%s120] %v141
                %v143 = vld [vmem:[%s127 + $0x38] sm:%s120]
                %144 = vst [vmem:[%s128 + $0x38] sm:%s120] %v143
                %v145 = vld [vmem:[%s127 + $0x100] sm:%s120]
                %146 = vst [vmem:[%s128 + $0x40] sm:%s120] %v145
                %v147 = vld [vmem:[%s127 + $0x108] sm:%s120]
                %148 = vst [vmem:[%s128 + $0x48] sm:%s120] %v147
                %v149 = vld [vmem:[%s127 + $0x110] sm:%s120]
                %150 = vst [vmem:[%s128 + $0x50] sm:%s120] %v149
                %v151 = vld [vmem:[%s127 + $0x118] sm:%s120]
                %152 = vst [vmem:[%s128 + $0x58] sm:%s120] %v151
                %v153 = vld [vmem:[%s127 + $0x120] sm:%s120]
                %154 = vst [vmem:[%s128 + $0x60] sm:%s120] %v153
                %v155 = vld [vmem:[%s127 + $0x128] sm:%s120]
                %156 = vst [vmem:[%s128 + $0x68] sm:%s120] %v155
                %v157 = vld [vmem:[%s127 + $0x130] sm:%s120]
                %158 = vst [vmem:[%s128 + $0x70] sm:%s120] %v157
                %v159 = vld [vmem:[%s127 + $0x138] sm:%s120]
                %160 = vst [vmem:[%s128 + $0x78] sm:%s120] %v159
                %v161 = vld [vmem:[%s127 + $0x200] sm:%s120]
                %162 = vst [vmem:[%s128 + $0x80] sm:%s120] %v161
                %v163 = vld [vmem:[%s127 + $0x208] sm:%s120]
                %164 = vst [vmem:[%s128 + $0x88] sm:%s120] %v163
                %v165 = vld [vmem:[%s127 + $0x210] sm:%s120]
                %166 = vst [vmem:[%s128 + $0x90] sm:%s120] %v165
                %v167 = vld [vmem:[%s127 + $0x218] sm:%s120]
                %168 = vst [vmem:[%s128 + $0x98] sm:%s120] %v167
                %v169 = vld [vmem:[%s127 + $0x220] sm:%s120]
                %170 = vst [vmem:[%s128 + $0xa0] sm:%s120] %v169
                %v171 = vld [vmem:[%s127 + $0x228] sm:%s120]
                %172 = vst [vmem:[%s128 + $0xa8] sm:%s120] %v171
                %v173 = vld [vmem:[%s127 + $0x230] sm:%s120]
                %174 = vst [vmem:[%s128 + $0xb0] sm:%s120] %v173
                %v175 = vld [vmem:[%s127 + $0x238] sm:%s120]
                %176 = vst [vmem:[%s128 + $0xb8] sm:%s120] %v175
                %v177 = vld [vmem:[%s127 + $0x300] sm:%s120]
                %178 = vst [vmem:[%s128 + $0xc0] sm:%s120] %v177
                %v179 = vld [vmem:[%s127 + $0x308] sm:%s120]
                %180 = vst [vmem:[%s128 + $0xc8] sm:%s120] %v179
                %v181 = vld [vmem:[%s127 + $0x310] sm:%s120]
                %182 = vst [vmem:[%s128 + $0xd0] sm:%s120] %v181
                %v183 = vld [vmem:[%s127 + $0x318] sm:%s120]
                %184 = vst [vmem:[%s128 + $0xd8] sm:%s120] %v183
                %v185 = vld [vmem:[%s127 + $0x320] sm:%s120]
                %186 = vst [vmem:[%s128 + $0xe0] sm:%s120] %v185
                %v187 = vld [vmem:[%s127 + $0x328] sm:%s120]
                %188 = vst [vmem:[%s128 + $0xe8] sm:%s120] %v187
                %v189 = vld [vmem:[%s127 + $0x330] sm:%s120]
                %190 = vst [vmem:[%s128 + $0xf0] sm:%s120] %v189
                %v191 = vld [vmem:[%s127 + $0x338] sm:%s120]
                %192 = vst [vmem:[%s128 + $0xf8] sm:%s120] %v191
              $region41: #{hybrid_attention.3} parent=35 // loop_footer
                %s126 = sadd.s32 1, %s122
              $region42: #{hybrid_attention.3} parent=35 // loop_footer_branch
                %121 = sbr.rel target = $region38
              $region43: #{hybrid_attention.3} parent=35 // loop_exit
                _
            $region36: #{hybrid_attention.3} parent=27 // pred_fallthru
              _
          $region28: #{hybrid_attention.3} parent=23 // pred_fallthru
            _
          %269 = vnop
        $region24: #{hybrid_attention.3} parent=19 // pred_fallthru
          _
      $region20: #{hybrid_attention.3} parent=5 // pred_fallthru
        _
      %p270 = scmp.le.s32.totalorder 1, %s8
      %p271 = scmp.lt.s32.totalorder %s8, 5
      %p272 = pnand %p270, %p271
      %p273 = pneg %p272
      // Predicated region
      $region59: #{hybrid_attention.3} parent=5 // pred_check
        _
      $region60: #{hybrid_attention.3} parent=5 // pred_check_branch
        %275 = sbr.rel (%p272) target = $region62
      $region61: #{hybrid_attention.3} parent=5 // pred_region
        %s276 = ssub.s32 %s8, 1
        %s277 = sand.u32 %s42, 1
        %s278 = sand.u32 %s42, 1
        %s279 = smul.addr %s278, 256
        %s280 = scalar_lea.vmem [#allocation2], %s279
        // Predicated region
        $region63: #{hybrid_attention.3} parent=61 // pred_check
          %p281 = pneg %p55
        $region64: #{hybrid_attention.3} parent=61 // pred_check_branch
          %283 = sbr.rel (%p281) target = $region66
        $region65: #{hybrid_attention.3} parent=61 // pred_region
          _
        $region66: #{hybrid_attention.3} parent=61 // pred_fallthru
          _
        %p284 = pneg %p29
        %p285 = pneg %p26
        %s286 = sand.u32 %s42, 1
        %s287 = sand.u32 %s42, 1
        %s288 = smul.addr %s287, 256
        %s289 = scalar_lea.vmem [#allocation2], %s288
        %p290 = pneg %p55
        %p291 = pneg %p52
        %p292 = pneg %p81
        %p293 = pneg %p78
        %s294 = smul.u32 8, %s13
        %p295 = scmp.lt.s32.totalorder %s294, 31
        %s296 = scalar_select %p295, %s294, 31
        %s297 = smul.addr %s296, 8
        %s298 = scalar_lea.vmem %s2, %s297
        %s299 = smul.u32 8, %s13
        %s300 = smul.u32 8, %s13
        %p301 = scmp.lt.s32.totalorder %s300, 31
        %s302 = scalar_select %p301, %s300, 31
        %s303 = smul.addr %s302, 8
        %s304 = scalar_lea.vmem %s2, %s303
        %s305 = smul.u32 8, %s13
        %v306 = vld [vmem:[%s0] sm:$0xf]
        %v307 = vld [vmem:[%s280] sm:$0xff]
        %v308 = vld [vmem:[%s280 + $0x8] sm:$0xff]
        %v309 = vld [vmem:[%s280 + $0x10] sm:$0xff]
        %v310 = vld [vmem:[%s280 + $0x18] sm:$0xff]
        %v311 = vld [vmem:[%s280 + $0x20] sm:$0xff]
        %v312 = vld [vmem:[%s280 + $0x28] sm:$0xff]
        %v313 = vld [vmem:[%s280 + $0x30] sm:$0xff]
        %v314 = vld [vmem:[%s280 + $0x38] sm:$0xff]
        %s316 = vtos %v306
        %v317 = vstv %s316
        %v319 = vmul.f32 %v317, %v307
        %v320 = vmul.f32 %v317, %v308
        %v321 = vmul.f32 %v317, %v309
        %v322 = vmul.f32 %v317, %v310
        %v323 = vmul.f32 %v317, %v311
        %v324 = vmul.f32 %v317, %v312
        %v325 = vmul.f32 %v317, %v313
        %v326 = vmul.f32 %v317, %v314
        %s327 = scalar_lea.vmem %s280, 64 [#allocation2]
        %v328 = vld [vmem:[%s327] sm:$0xff]
        %v329 = vld [vmem:[%s327 + $0x8] sm:$0xff]
        %v330 = vld [vmem:[%s327 + $0x10] sm:$0xff]
        %v331 = vld [vmem:[%s327 + $0x18] sm:$0xff]
        %v332 = vld [vmem:[%s327 + $0x20] sm:$0xff]
        %v333 = vld [vmem:[%s327 + $0x28] sm:$0xff]
        %v334 = vld [vmem:[%s327 + $0x30] sm:$0xff]
        %v335 = vld [vmem:[%s327 + $0x38] sm:$0xff]
        %v336 = vrot.slane %v306, 1
        %s337 = vtos %v336
        %v338 = vstv %s337
        %v340 = vmul.f32 %v338, %v328
        %v341 = vmul.f32 %v338, %v329
        %v342 = vmul.f32 %v338, %v330
        %v343 = vmul.f32 %v338, %v331
        %v344 = vmul.f32 %v338, %v332
        %v345 = vmul.f32 %v338, %v333
        %v346 = vmul.f32 %v338, %v334
        %v347 = vmul.f32 %v338, %v335
        %v348 = vadd.f32 %v319, %v340
        %v349 = vadd.f32 %v320, %v341
        %v350 = vadd.f32 %v321, %v342
        %v351 = vadd.f32 %v322, %v343
        %v352 = vadd.f32 %v323, %v344
        %v353 = vadd.f32 %v324, %v345
        %v354 = vadd.f32 %v325, %v346
        %v355 = vadd.f32 %v326, %v347
        %s356 = scalar_lea.vmem %s280, 128 [#allocation2]
        %v357 = vld [vmem:[%s356] sm:$0xff]
        %v358 = vld [vmem:[%s356 + $0x8] sm:$0xff]
        %v359 = vld [vmem:[%s356 + $0x10] sm:$0xff]
        %v360 = vld [vmem:[%s356 + $0x18] sm:$0xff]
        %v361 = vld [vmem:[%s356 + $0x20] sm:$0xff]
        %v362 = vld [vmem:[%s356 + $0x28] sm:$0xff]
        %v363 = vld [vmem:[%s356 + $0x30] sm:$0xff]
        %v364 = vld [vmem:[%s356 + $0x38] sm:$0xff]
        %v365 = vrot.slane %v306, 2
        %s366 = vtos %v365
        %v367 = vstv %s366
        %v369 = vmul.f32 %v367, %v357
        %v370 = vmul.f32 %v367, %v358
        %v371 = vmul.f32 %v367, %v359
        %v372 = vmul.f32 %v367, %v360
        %v373 = vmul.f32 %v367, %v361
        %v374 = vmul.f32 %v367, %v362
        %v375 = vmul.f32 %v367, %v363
        %v376 = vmul.f32 %v367, %v364
        %v377 = vadd.f32 %v348, %v369
        %v378 = vadd.f32 %v349, %v370
        %v379 = vadd.f32 %v350, %v371
        %v380 = vadd.f32 %v351, %v372
        %v381 = vadd.f32 %v352, %v373
        %v382 = vadd.f32 %v353, %v374
        %v383 = vadd.f32 %v354, %v375
        %v384 = vadd.f32 %v355, %v376
        %s385 = scalar_lea.vmem %s280, 192 [#allocation2]
        %v386 = vld [vmem:[%s385] sm:$0xff]
        %v387 = vld [vmem:[%s385 + $0x8] sm:$0xff]
        %v388 = vld [vmem:[%s385 + $0x10] sm:$0xff]
        %v389 = vld [vmem:[%s385 + $0x18] sm:$0xff]
        %v390 = vld [vmem:[%s385 + $0x20] sm:$0xff]
        %v391 = vld [vmem:[%s385 + $0x28] sm:$0xff]
        %v392 = vld [vmem:[%s385 + $0x30] sm:$0xff]
        %v393 = vld [vmem:[%s385 + $0x38] sm:$0xff]
        %v394 = vrot.slane %v306, 3
        %s395 = vtos %v394
        %v396 = vstv %s395
        %v398 = vmul.f32 %v396, %v386
        %v399 = vmul.f32 %v396, %v387
        %v400 = vmul.f32 %v396, %v388
        %v401 = vmul.f32 %v396, %v389
        %v402 = vmul.f32 %v396, %v390
        %v403 = vmul.f32 %v396, %v391
        %v404 = vmul.f32 %v396, %v392
        %v405 = vmul.f32 %v396, %v393
        %v406 = vadd.f32 %v377, %v398
        %v407 = vadd.f32 %v378, %v399
        %v408 = vadd.f32 %v379, %v400
        %v409 = vadd.f32 %v380, %v401
        %v410 = vadd.f32 %v381, %v402
        %v411 = vadd.f32 %v382, %v403
        %v412 = vadd.f32 %v383, %v404
        %v413 = vadd.f32 %v384, %v405
        %vm414 = vcmask 261120
        %415 = vst.msk [vmem:[%s304] sm:$0xff] %vm414, %v406
        %416 = vst.msk [vmem:[%s304 + $0x8] sm:$0xff] %vm414, %v407
        %417 = vst.msk [vmem:[%s304 + $0x10] sm:$0xff] %vm414, %v408
        %418 = vst.msk [vmem:[%s304 + $0x18] sm:$0xff] %vm414, %v409
        %419 = vst.msk [vmem:[%s304 + $0x20] sm:$0xff] %vm414, %v410
        %420 = vst.msk [vmem:[%s304 + $0x28] sm:$0xff] %vm414, %v411
        %421 = vst.msk [vmem:[%s304 + $0x30] sm:$0xff] %vm414, %v412
        %422 = vst.msk [vmem:[%s304 + $0x38] sm:$0xff] %vm414, %v413
        %s423 = smul.u32 8, %s13
        %p424 = scmp.lt.s32.totalorder %s423, 31
        %s425 = scalar_select %p424, %s423, 31
        %s426 = smul.addr %s425, 8
        %s427 = scalar_lea.vmem %s2, %s426
        // Predicated region
        $region67: #{hybrid_attention.3} parent=61 // pred_check
          %p428 = pneg %p78
        $region68: #{hybrid_attention.3} parent=61 // pred_check_branch
          %430 = sbr.rel (%p428) target = $region70
        $region69: #{hybrid_attention.3} parent=61 // pred_region
          %s431 = smul.u32 8, %s13
        $region70: #{hybrid_attention.3} parent=61 // pred_fallthru
          _
      $region62: #{hybrid_attention.3} parent=5 // pred_fallthru
        _
      %p432 = scmp.le.s32.totalorder 2, %s8
      // Predicated region
      $region71: #{hybrid_attention.3} parent=5 // pred_check
        %p433 = pneg %p432
      $region72: #{hybrid_attention.3} parent=5 // pred_check_branch
        %435 = sbr.rel (%p433) target = $region74
      $region73: #{hybrid_attention.3} parent=5 // pred_region
        %s436 = ssub.s32 %s8, 2
        // Predicated region
        $region75: #{hybrid_attention.3} parent=73 // pred_check
          %p437 = pneg %p84
        $region76: #{hybrid_attention.3} parent=73 // pred_check_branch
          %439 = sbr.rel (%p437) target = $region78
        $region77: #{hybrid_attention.3} parent=73 // pred_region
          %s440 = smul.u32 8, %s14
          %p441 = scmp.lt.s32.totalorder %s440, 31
          %s442 = scalar_select %p441, %s440, 31
          %s443 = smul.addr %s442, 8
          %s444 = scalar_lea.vmem %s2, %s443
        $region78: #{hybrid_attention.3} parent=73 // pred_fallthru
          _
      $region74: #{hybrid_attention.3} parent=5 // pred_fallthru
        _
    $region6: #{hybrid_attention.3} parent=1 // loop_footer
      %s12 = sadd.s32 1, %s8
    $region7: #{hybrid_attention.3} parent=1 // loop_footer_branch
      %7 = sbr.rel target = $region3
    $region8: #{hybrid_attention.3} parent=1 // loop_exit
      _

// kernel: hybrid_attention.2
$region0: #{hybrid_attention.2}
  #allocation0 [shape = 'u32[]', space=smem, size = 0x4, offset = 0x4, fixed_abs, tag = 'smem constant byte address 0x4 - core index']
  #allocation1 [shape = 'u32[72,128]{1,0:T(1,128)}', space=vmem, size = 0x9000, scoped, tag = 'internal scratch']
  #allocation2 [shape = 'f32[4,64]{1,0:T(4,128)}', space=vmem, size = 0x800, scoped, tag = 'scratch operand']
  %s0 = inlined_call_operand.vmem [shape: f32[4,256,32], index: 0, kind: input, shape index: {}]
  %s1 = inlined_call_operand.vmem [shape: f32[32,64], index: 1, kind: input, shape index: {}]
  %s2 = inlined_call_operand.vmem [shape: f32[1,64], index: 2, kind: input, shape index: {}]
  %s3 = inlined_call_operand.vmem [shape: f32[1,64], index: 3, kind: input, shape index: {}]
  %s4 = inlined_call_operand.vmem [shape: f32[4,1], index: 4, kind: output, shape index: {}]
  %s5 = sld [smem:[#allocation0]]
  $region95: #{hybrid_attention.2} parent=0
    _
  %s7 = ssub.s32 1, %s5
  %s8 = scalar_select 0, %s7, %s5
  $region1: #{hybrid_attention.2} parent=0
    #allocation3 [shape = 'u8[262144]{0}', space=vmem, size = 0x40000, scoped, tag = 'input window, operand 0']
    loop: start=0, step=1, limit=6
    $region2: #{hybrid_attention.2} parent=1 // loop_pre_header
      _
    $region3: #{hybrid_attention.2} parent=1 // loop_header
      %s10 = sphi 0, %s14
      %p11 = scmp.ge.s32.totalorder %s10, 6
      %s20 = sphi 0, %s22
      %s23 = sphi 0, %s20
      %s24 = sphi 0, %s23
      %s40 = sphi 0, %s24
      %s44 = sphi 0, %s44
      %s46 = sphi 0, %s44
      %s47 = sphi 0, %s46
      %s61 = sphi 0, %s47
      %s65 = sphi 0, %s65
      %s67 = sphi 0, %s65
      %s68 = sphi 0, %s67
      %s82 = sphi 0, %s68
      %s86 = sphi 0, %s86
      %s88 = sphi 0, %s86
      %s89 = sphi 0, %s88
      %s103 = sphi 0, %s89
      %s107 = sphi 0, %s107
      %s109 = sphi 0, %s107
      %s110 = sphi 0, %s109
      %s124 = sphi 0, %s110
    $region4: #{hybrid_attention.2} parent=1 // loop_header_branch
      %13 = sbr.rel (%p11) target = $region8
    $region5: #{hybrid_attention.2} parent=1 // loop_body
      %s15 = ssub.s32 %s10, 1
      %s16 = ssub.s32 %s10, 2
      %s17 = sadd.s32 %s10, 1
      %s18 = ssub.s32 %s10, %s17
      %p19 = scmp.eq.s32.totalorder %s18, 0
      %s21 = sadd.s32 %s20, 1
      %s22 = scalar_select %p19, %s20, %s21
      %p25 = pneg %p19
      %p26 = scmp.eq.s32.totalorder %s10, 3
      %p27 = por %p25, %p26
      %p28 = scmp.ne.s32.totalorder %s20, %s23
      %p29 = scmp.eq.s32.totalorder %s10, 0
      %p30 = por %p28, %p29
      %p31 = scmp.ne.s32.totalorder %s20, %s23
      %p32 = scmp.eq.s32.totalorder %s15, 3
      %p33 = por %p31, %p32
      %p34 = scmp.ne.s32.totalorder %s23, %s24
      %p35 = scmp.eq.s32.totalorder %s15, 0
      %p36 = por %p34, %p35
      %p37 = scmp.ne.s32.totalorder %s23, %s24
      %p38 = scmp.eq.s32.totalorder %s16, 3
      %p39 = por %p37, %p38
      %p41 = scmp.ne.s32.totalorder %s24, %s40
      %p42 = scmp.eq.s32.totalorder %s16, 0
      %p43 = por %p41, %p42
      %s45 = sadd.s32 %s44, 1
      %p48 = scmp.eq.s32.totalorder %s10, 3
      %p49 = scmp.ne.s32.totalorder %s44, %s46
      %p50 = scmp.eq.s32.totalorder %s10, 0
      %p51 = por %p49, %p50
      %p52 = scmp.ne.s32.totalorder %s44, %s46
      %p53 = scmp.eq.s32.totalorder %s15, 3
      %p54 = por %p52, %p53
      %p55 = scmp.ne.s32.totalorder %s46, %s47
      %p56 = scmp.eq.s32.totalorder %s15, 0
      %p57 = por %p55, %p56
      %p58 = scmp.ne.s32.totalorder %s46, %s47
      %p59 = scmp.eq.s32.totalorder %s16, 3
      %p60 = por %p58, %p59
      %p62 = scmp.ne.s32.totalorder %s47, %s61
      %p63 = scmp.eq.s32.totalorder %s16, 0
      %p64 = por %p62, %p63
      %s66 = sadd.s32 %s65, 1
      %p69 = scmp.eq.s32.totalorder %s10, 3
      %p70 = scmp.ne.s32.totalorder %s65, %s67
      %p71 = scmp.eq.s32.totalorder %s10, 0
      %p72 = por %p70, %p71
      %p73 = scmp.ne.s32.totalorder %s65, %s67
      %p74 = scmp.eq.s32.totalorder %s15, 3
      %p75 = por %p73, %p74
      %p76 = scmp.ne.s32.totalorder %s67, %s68
      %p77 = scmp.eq.s32.totalorder %s15, 0
      %p78 = por %p76, %p77
      %p79 = scmp.ne.s32.totalorder %s67, %s68
      %p80 = scmp.eq.s32.totalorder %s16, 3
      %p81 = por %p79, %p80
      %p83 = scmp.ne.s32.totalorder %s68, %s82
      %p84 = scmp.eq.s32.totalorder %s16, 0
      %p85 = por %p83, %p84
      %s87 = sadd.s32 %s86, 1
      %p90 = scmp.eq.s32.totalorder %s10, 3
      %p91 = scmp.ne.s32.totalorder %s86, %s88
      %p92 = scmp.eq.s32.totalorder %s10, 0
      %p93 = por %p91, %p92
      %p94 = scmp.ne.s32.totalorder %s86, %s88
      %p95 = scmp.eq.s32.totalorder %s15, 3
      %p96 = por %p94, %p95
      %p97 = scmp.ne.s32.totalorder %s88, %s89
      %p98 = scmp.eq.s32.totalorder %s15, 0
      %p99 = por %p97, %p98
      %p100 = scmp.ne.s32.totalorder %s88, %s89
      %p101 = scmp.eq.s32.totalorder %s16, 3
      %p102 = por %p100, %p101
      %p104 = scmp.ne.s32.totalorder %s89, %s103
      %p105 = scmp.eq.s32.totalorder %s16, 0
      %p106 = por %p104, %p105
      %s108 = sadd.s32 %s107, 1
      %p111 = scmp.eq.s32.totalorder %s10, 3
      %p112 = scmp.ne.s32.totalorder %s107, %s109
      %p113 = scmp.eq.s32.totalorder %s10, 0
      %p114 = por %p112, %p113
      %p115 = scmp.ne.s32.totalorder %s107, %s109
      %p116 = scmp.eq.s32.totalorder %s15, 3
      %p117 = por %p115, %p116
      %p118 = scmp.ne.s32.totalorder %s109, %s110
      %p119 = scmp.eq.s32.totalorder %s15, 0
      %p120 = por %p118, %p119
      %p121 = scmp.ne.s32.totalorder %s109, %s110
      %p122 = scmp.eq.s32.totalorder %s16, 3
      %p123 = por %p121, %p122
      %p125 = scmp.ne.s32.totalorder %s110, %s124
      %p126 = scmp.eq.s32.totalorder %s16, 0
      %p127 = por %p125, %p126
      %p128 = scmp.le.s32.totalorder 1, %s10
      %p129 = scmp.lt.s32.totalorder %s10, 5
      %p130 = pnand %p128, %p129
      %p131 = pneg %p130
      // Predicated region
      $region9: #{hybrid_attention.2} parent=5 // pred_check
        _
      $region10: #{hybrid_attention.2} parent=5 // pred_check_branch
        %133 = sbr.rel (%p130) target = $region12
      $region11: #{hybrid_attention.2} parent=5 // pred_region
        %s134 = ssub.s32 %s10, 1
        // Predicated region
        $region13: #{hybrid_attention.2} parent=11 // pred_check
          %p135 = pneg %p57
        $region14: #{hybrid_attention.2} parent=11 // pred_check_branch
          %137 = sbr.rel (%p135) target = $region16
        $region15: #{hybrid_attention.2} parent=11 // pred_region
          _
        $region16: #{hybrid_attention.2} parent=11 // pred_fallthru
          _
        // Predicated region
        $region17: #{hybrid_attention.2} parent=11 // pred_check
          %p138 = pneg %p78
        $region18: #{hybrid_attention.2} parent=11 // pred_check_branch
          %140 = sbr.rel (%p138) target = $region20
        $region19: #{hybrid_attention.2} parent=11 // pred_region
          _
        $region20: #{hybrid_attention.2} parent=11 // pred_fallthru
          _
        // Predicated region
        $region21: #{hybrid_attention.2} parent=11 // pred_check
          %p141 = pneg %p99
        $region22: #{hybrid_attention.2} parent=11 // pred_check_branch
          %143 = sbr.rel (%p141) target = $region24
        $region23: #{hybrid_attention.2} parent=11 // pred_region
          _
        $region24: #{hybrid_attention.2} parent=11 // pred_fallthru
          _
      $region12: #{hybrid_attention.2} parent=5 // pred_fallthru
        _
      %p144 = scmp.lt.s32.totalorder %s10, 4
      // Predicated region
      $region25: #{hybrid_attention.2} parent=5 // pred_check
        %p145 = pneg %p144
      $region26: #{hybrid_attention.2} parent=5 // pred_check_branch
        %147 = sbr.rel (%p145) target = $region28
      $region27: #{hybrid_attention.2} parent=5 // pred_region
        // Predicated region
        $region29: #{hybrid_attention.2} parent=27 // pred_check
          %p148 = pneg %p30
        $region30: #{hybrid_attention.2} parent=27 // pred_check_branch
          %150 = sbr.rel (%p148) target = $region32
        $region31: #{hybrid_attention.2} parent=27 // pred_region
          %s151 = sand.u32 %s20, 1
          %s152 = sand.u32 %s20, 1
          %s153 = smul.addr %s152, 256
          %s154 = scalar_lea.vmem [#allocation3], %s153
          %s155 = smul.u32 8, %s10
          %s156 = smul.addr %s155, 8
          %s157 = scalar_lea.vmem %s0, %s156
          // Predicated region
          $region33: #{hybrid_attention.2} parent=31 // pred_check
            _
          $region34: #{hybrid_attention.2} parent=31 // pred_check_branch
            %159 = sbr.rel (0) target = $region36
          $region35: #{hybrid_attention.2} parent=31 // pred_region
            // Predicated region
            $region37: #{hybrid_attention.2} parent=35 // pred_check
              _
            $region38: #{hybrid_attention.2} parent=35 // pred_check_branch
              %161 = sbr.rel (0) target = $region40
            $region39: #{hybrid_attention.2} parent=35 // pred_region
              // Predicated region
              $region52: #{hybrid_attention.2} parent=39 // pred_check
                _
              $region53: #{hybrid_attention.2} parent=39 // pred_check_branch
                %239 = sbr.rel (0) target = $region55
              $region54: #{hybrid_attention.2} parent=39 // pred_region
                loop: start=0, step=1, limit=1
                $region56: #{hybrid_attention.2} parent=54 // loop_pre_header
                  _
                $region57: #{hybrid_attention.2} parent=54 // loop_header
                  %s241 = sphi 0, %s245
                  %p242 = scmp.ge.s32.totalorder %s241, 1
                  %s246 = sphi %s157, %s157
                  %s247 = sphi %s154, %s154
                $region58: #{hybrid_attention.2} parent=54 // loop_header_branch
                  %244 = sbr.rel (%p242) target = $region62
                $region59: #{hybrid_attention.2} parent=54 // loop_body
                  %v248 = vld [vmem:[%s246] sm:$0xff]
                  %249 = vst [vmem:[%s247] sm:$0xff] %v248
                  %v250 = vld [vmem:[%s246 + $0x8] sm:$0xff]
                  %251 = vst [vmem:[%s247 + $0x8] sm:$0xff] %v250
                  %v252 = vld [vmem:[%s246 + $0x10] sm:$0xff]
                  %253 = vst [vmem:[%s247 + $0x10] sm:$0xff] %v252
                  %v254 = vld [vmem:[%s246 + $0x18] sm:$0xff]
                  %255 = vst [vmem:[%s247 + $0x18] sm:$0xff] %v254
                  %v256 = vld [vmem:[%s246 + $0x20] sm:$0xff]
                  %257 = vst [vmem:[%s247 + $0x20] sm:$0xff] %v256
                  %v258 = vld [vmem:[%s246 + $0x28] sm:$0xff]
                  %259 = vst [vmem:[%s247 + $0x28] sm:$0xff] %v258
                  %v260 = vld [vmem:[%s246 + $0x30] sm:$0xff]
                  %261 = vst [vmem:[%s247 + $0x30] sm:$0xff] %v260
                  %v262 = vld [vmem:[%s246 + $0x38] sm:$0xff]
                  %263 = vst [vmem:[%s247 + $0x38] sm:$0xff] %v262
                  %v264 = vld [vmem:[%s246 + $0x100] sm:$0xff]
                  %265 = vst [vmem:[%s247 + $0x40] sm:$0xff] %v264
                  %v266 = vld [vmem:[%s246 + $0x108] sm:$0xff]
                  %267 = vst [vmem:[%s247 + $0x48] sm:$0xff] %v266
                  %v268 = vld [vmem:[%s246 + $0x110] sm:$0xff]
                  %269 = vst [vmem:[%s247 + $0x50] sm:$0xff] %v268
                  %v270 = vld [vmem:[%s246 + $0x118] sm:$0xff]
                  %271 = vst [vmem:[%s247 + $0x58] sm:$0xff] %v270
                  %v272 = vld [vmem:[%s246 + $0x120] sm:$0xff]
                  %273 = vst [vmem:[%s247 + $0x60] sm:$0xff] %v272
                  %v274 = vld [vmem:[%s246 + $0x128] sm:$0xff]
                  %275 = vst [vmem:[%s247 + $0x68] sm:$0xff] %v274
                  %v276 = vld [vmem:[%s246 + $0x130] sm:$0xff]
                  %277 = vst [vmem:[%s247 + $0x70] sm:$0xff] %v276
                  %v278 = vld [vmem:[%s246 + $0x138] sm:$0xff]
                  %279 = vst [vmem:[%s247 + $0x78] sm:$0xff] %v278
                  %v280 = vld [vmem:[%s246 + $0x200] sm:$0xff]
                  %281 = vst [vmem:[%s247 + $0x80] sm:$0xff] %v280
                  %v282 = vld [vmem:[%s246 + $0x208] sm:$0xff]
                  %283 = vst [vmem:[%s247 + $0x88] sm:$0xff] %v282
                  %v284 = vld [vmem:[%s246 + $0x210] sm:$0xff]
                  %285 = vst [vmem:[%s247 + $0x90] sm:$0xff] %v284
                  %v286 = vld [vmem:[%s246 + $0x218] sm:$0xff]
                  %287 = vst [vmem:[%s247 + $0x98] sm:$0xff] %v286
                  %v288 = vld [vmem:[%s246 + $0x220] sm:$0xff]
                  %289 = vst [vmem:[%s247 + $0xa0] sm:$0xff] %v288
                  %v290 = vld [vmem:[%s246 + $0x228] sm:$0xff]
                  %291 = vst [vmem:[%s247 + $0xa8] sm:$0xff] %v290
                  %v292 = vld [vmem:[%s246 + $0x230] sm:$0xff]
                  %293 = vst [vmem:[%s247 + $0xb0] sm:$0xff] %v292
                  %v294 = vld [vmem:[%s246 + $0x238] sm:$0xff]
                  %295 = vst [vmem:[%s247 + $0xb8] sm:$0xff] %v294
                  %v296 = vld [vmem:[%s246 + $0x300] sm:$0xff]
                  %297 = vst [vmem:[%s247 + $0xc0] sm:$0xff] %v296
                  %v298 = vld [vmem:[%s246 + $0x308] sm:$0xff]
                  %299 = vst [vmem:[%s247 + $0xc8] sm:$0xff] %v298
                  %v300 = vld [vmem:[%s246 + $0x310] sm:$0xff]
                  %301 = vst [vmem:[%s247 + $0xd0] sm:$0xff] %v300
                  %v302 = vld [vmem:[%s246 + $0x318] sm:$0xff]
                  %303 = vst [vmem:[%s247 + $0xd8] sm:$0xff] %v302
                  %v304 = vld [vmem:[%s246 + $0x320] sm:$0xff]
                  %305 = vst [vmem:[%s247 + $0xe0] sm:$0xff] %v304
                  %v306 = vld [vmem:[%s246 + $0x328] sm:$0xff]
                  %307 = vst [vmem:[%s247 + $0xe8] sm:$0xff] %v306
                  %v308 = vld [vmem:[%s246 + $0x330] sm:$0xff]
                  %309 = vst [vmem:[%s247 + $0xf0] sm:$0xff] %v308
                  %v310 = vld [vmem:[%s246 + $0x338] sm:$0xff]
                  %311 = vst [vmem:[%s247 + $0xf8] sm:$0xff] %v310
                $region60: #{hybrid_attention.2} parent=54 // loop_footer
                  %s245 = sadd.s32 1, %s241
                $region61: #{hybrid_attention.2} parent=54 // loop_footer_branch
                  %240 = sbr.rel target = $region57
                $region62: #{hybrid_attention.2} parent=54 // loop_exit
                  _
              $region55: #{hybrid_attention.2} parent=39 // pred_fallthru
                _
              // Predicated region
              $region63: #{hybrid_attention.2} parent=39 // pred_check
                _
              $region64: #{hybrid_attention.2} parent=39 // pred_check_branch
                %313 = sbr.rel target = $region66
              $region65: #{hybrid_attention.2} parent=39 // pred_region
                _
              $region66: #{hybrid_attention.2} parent=39 // pred_fallthru
                _
            $region40: #{hybrid_attention.2} parent=35 // pred_fallthru
              _
            // Predicated region
            $region41: #{hybrid_attention.2} parent=35 // pred_check
              _
            $region42: #{hybrid_attention.2} parent=35 // pred_check_branch
              %163 = sbr.rel target = $region44
            $region43: #{hybrid_attention.2} parent=35 // pred_region
              %s165 = ssub.s32 256, 1
              loop: start=0, step=1, limit=1
              $region45: #{hybrid_attention.2} parent=43 // loop_pre_header
                _
              $region46: #{hybrid_attention.2} parent=43 // loop_header
                %s167 = sphi 0, %s171
                %p168 = scmp.ge.s32.totalorder %s167, 1
                %s172 = sphi %s157, %s157
                %s173 = sphi %s154, %s154
              $region47: #{hybrid_attention.2} parent=43 // loop_header_branch
                %170 = sbr.rel (%p168) target = $region51
              $region48: #{hybrid_attention.2} parent=43 // loop_body
                %v174 = vld [vmem:[%s172] sm:%s165]
                %175 = vst [vmem:[%s173] sm:%s165] %v174
                %v176 = vld [vmem:[%s172 + $0x8] sm:%s165]
                %177 = vst [vmem:[%s173 + $0x8] sm:%s165] %v176
                %v178 = vld [vmem:[%s172 + $0x10] sm:%s165]
                %179 = vst [vmem:[%s173 + $0x10] sm:%s165] %v178
                %v180 = vld [vmem:[%s172 + $0x18] sm:%s165]
                %181 = vst [vmem:[%s173 + $0x18] sm:%s165] %v180
                %v182 = vld [vmem:[%s172 + $0x20] sm:%s165]
                %183 = vst [vmem:[%s173 + $0x20] sm:%s165] %v182
                %v184 = vld [vmem:[%s172 + $0x28] sm:%s165]
                %185 = vst [vmem:[%s173 + $0x28] sm:%s165] %v184
                %v186 = vld [vmem:[%s172 + $0x30] sm:%s165]
                %187 = vst [vmem:[%s173 + $0x30] sm:%s165] %v186
                %v188 = vld [vmem:[%s172 + $0x38] sm:%s165]
                %189 = vst [vmem:[%s173 + $0x38] sm:%s165] %v188
                %v190 = vld [vmem:[%s172 + $0x100] sm:%s165]
                %191 = vst [vmem:[%s173 + $0x40] sm:%s165] %v190
                %v192 = vld [vmem:[%s172 + $0x108] sm:%s165]
                %193 = vst [vmem:[%s173 + $0x48] sm:%s165] %v192
                %v194 = vld [vmem:[%s172 + $0x110] sm:%s165]
                %195 = vst [vmem:[%s173 + $0x50] sm:%s165] %v194
                %v196 = vld [vmem:[%s172 + $0x118] sm:%s165]
                %197 = vst [vmem:[%s173 + $0x58] sm:%s165] %v196
                %v198 = vld [vmem:[%s172 + $0x120] sm:%s165]
                %199 = vst [vmem:[%s173 + $0x60] sm:%s165] %v198
                %v200 = vld [vmem:[%s172 + $0x128] sm:%s165]
                %201 = vst [vmem:[%s173 + $0x68] sm:%s165] %v200
                %v202 = vld [vmem:[%s172 + $0x130] sm:%s165]
                %203 = vst [vmem:[%s173 + $0x70] sm:%s165] %v202
                %v204 = vld [vmem:[%s172 + $0x138] sm:%s165]
                %205 = vst [vmem:[%s173 + $0x78] sm:%s165] %v204
                %v206 = vld [vmem:[%s172 + $0x200] sm:%s165]
                %207 = vst [vmem:[%s173 + $0x80] sm:%s165] %v206
                %v208 = vld [vmem:[%s172 + $0x208] sm:%s165]
                %209 = vst [vmem:[%s173 + $0x88] sm:%s165] %v208
                %v210 = vld [vmem:[%s172 + $0x210] sm:%s165]
                %211 = vst [vmem:[%s173 + $0x90] sm:%s165] %v210
                %v212 = vld [vmem:[%s172 + $0x218] sm:%s165]
                %213 = vst [vmem:[%s173 + $0x98] sm:%s165] %v212
                %v214 = vld [vmem:[%s172 + $0x220] sm:%s165]
                %215 = vst [vmem:[%s173 + $0xa0] sm:%s165] %v214
                %v216 = vld [vmem:[%s172 + $0x228] sm:%s165]
                %217 = vst [vmem:[%s173 + $0xa8] sm:%s165] %v216
                %v218 = vld [vmem:[%s172 + $0x230] sm:%s165]
                %219 = vst [vmem:[%s173 + $0xb0] sm:%s165] %v218
                %v220 = vld [vmem:[%s172 + $0x238] sm:%s165]
                %221 = vst [vmem:[%s173 + $0xb8] sm:%s165] %v220
                %v222 = vld [vmem:[%s172 + $0x300] sm:%s165]
                %223 = vst [vmem:[%s173 + $0xc0] sm:%s165] %v222
                %v224 = vld [vmem:[%s172 + $0x308] sm:%s165]
                %225 = vst [vmem:[%s173 + $0xc8] sm:%s165] %v224
                %v226 = vld [vmem:[%s172 + $0x310] sm:%s165]
                %227 = vst [vmem:[%s173 + $0xd0] sm:%s165] %v226
                %v228 = vld [vmem:[%s172 + $0x318] sm:%s165]
                %229 = vst [vmem:[%s173 + $0xd8] sm:%s165] %v228
                %v230 = vld [vmem:[%s172 + $0x320] sm:%s165]
                %231 = vst [vmem:[%s173 + $0xe0] sm:%s165] %v230
                %v232 = vld [vmem:[%s172 + $0x328] sm:%s165]
                %233 = vst [vmem:[%s173 + $0xe8] sm:%s165] %v232
                %v234 = vld [vmem:[%s172 + $0x330] sm:%s165]
                %235 = vst [vmem:[%s173 + $0xf0] sm:%s165] %v234
                %v236 = vld [vmem:[%s172 + $0x338] sm:%s165]
                %237 = vst [vmem:[%s173 + $0xf8] sm:%s165] %v236
              $region49: #{hybrid_attention.2} parent=43 // loop_footer
                %s171 = sadd.s32 1, %s167
              $region50: #{hybrid_attention.2} parent=43 // loop_footer_branch
                %166 = sbr.rel target = $region46
              $region51: #{hybrid_attention.2} parent=43 // loop_exit
                _
            $region44: #{hybrid_attention.2} parent=35 // pred_fallthru
              _
          $region36: #{hybrid_attention.2} parent=31 // pred_fallthru
            _
          %314 = vnop
        $region32: #{hybrid_attention.2} parent=27 // pred_fallthru
          _
      $region28: #{hybrid_attention.2} parent=5 // pred_fallthru
        _
      %p315 = scmp.le.s32.totalorder 1, %s10
      %p316 = scmp.lt.s32.totalorder %s10, 5
      %p317 = pnand %p315, %p316
      %p318 = pneg %p317
      // Predicated region
      $region67: #{hybrid_attention.2} parent=5 // pred_check
        _
      $region68: #{hybrid_attention.2} parent=5 // pred_check_branch
        %320 = sbr.rel (%p317) target = $region70
      $region69: #{hybrid_attention.2} parent=5 // pred_region
        %s321 = ssub.s32 %s10, 1
        %s322 = sand.u32 %s23, 1
        %s323 = sand.u32 %s23, 1
        %s324 = smul.addr %s323, 256
        %s325 = scalar_lea.vmem [#allocation3], %s324
        // Predicated region
        $region71: #{hybrid_attention.2} parent=69 // pred_check
          %p326 = pneg %p36
        $region72: #{hybrid_attention.2} parent=69 // pred_check_branch
          %328 = sbr.rel (%p326) target = $region74
        $region73: #{hybrid_attention.2} parent=69 // pred_region
          _
        $region74: #{hybrid_attention.2} parent=69 // pred_fallthru
          _
        %s329 = sand.u32 %s23, 1
        %s330 = sand.u32 %s23, 1
        %s331 = smul.addr %s330, 256
        %s332 = scalar_lea.vmem [#allocation3], %s331
        %p333 = pneg %p36
        %p334 = pneg %p33
        %p335 = pneg %p57
        %p336 = pneg %p54
        %p337 = pneg %p78
        %p338 = pneg %p75
        %p339 = pneg %p99
        %p340 = pneg %p96
        %p341 = pneg %p120
        %p342 = pneg %p117
        %s343 = smul.u32 8, %s15
        %p345 = scmp.eq.s32.totalorder %s15, 0
        // Predicated region
        $region75: #{hybrid_attention.2} parent=69 // pred_check
          %p346 = pneg %p345
        $region76: #{hybrid_attention.2} parent=69 // pred_check_branch
          %348 = sbr.rel (%p346) target = $region78
        $region77: #{hybrid_attention.2} parent=69 // pred_region
          %vm349 = vcmask 519168
          %350 = vst.msk [vmem:[#allocation2] sm:$0xf] %vm349, 0.0
          %vm351 = vcmask 3072
          %352 = vst.msk [vmem:[%s4] sm:$0xf] %vm351, 0.0
        $region78: #{hybrid_attention.2} parent=69 // pred_fallthru
          _
        %v353 = vld [vmem:[%s325] sm:$0xff]
        %v354 = vld [vmem:[%s325 + $0x8] sm:$0xff]
        %v355 = vld [vmem:[%s325 + $0x10] sm:$0xff]
        %v356 = vld [vmem:[%s325 + $0x18] sm:$0xff]
        %v357 = vld [vmem:[%s325 + $0x20] sm:$0xff]
        %v358 = vld [vmem:[%s325 + $0x28] sm:$0xff]
        %v359 = vld [vmem:[%s325 + $0x30] sm:$0xff]
        %v360 = vld [vmem:[%s325 + $0x38] sm:$0xff]
        %v361 = vld [vmem:[%s325 + $0x40] sm:$0xff]
        %v362 = vld [vmem:[%s325 + $0x48] sm:$0xff]
        %v363 = vld [vmem:[%s325 + $0x50] sm:$0xff]
        %v364 = vld [vmem:[%s325 + $0x58] sm:$0xff]
        %v365 = vld [vmem:[%s325 + $0x60] sm:$0xff]
        %v366 = vld [vmem:[%s325 + $0x68] sm:$0xff]
        %v367 = vld [vmem:[%s325 + $0x70] sm:$0xff]
        %v368 = vld [vmem:[%s325 + $0x78] sm:$0xff]
        %v369 = vld [vmem:[%s325 + $0x80] sm:$0xff]
        %v370 = vld [vmem:[%s325 + $0x88] sm:$0xff]
        %v371 = vld [vmem:[%s325 + $0x90] sm:$0xff]
        %v372 = vld [vmem:[%s325 + $0x98] sm:$0xff]
        %v373 = vld [vmem:[%s325 + $0xa0] sm:$0xff]
        %v374 = vld [vmem:[%s325 + $0xa8] sm:$0xff]
        %v375 = vld [vmem:[%s325 + $0xb0] sm:$0xff]
        %v376 = vld [vmem:[%s325 + $0xb8] sm:$0xff]
        %v377 = vld [vmem:[%s325 + $0xc0] sm:$0xff]
        %v378 = vld [vmem:[%s325 + $0xc8] sm:$0xff]
        %v379 = vld [vmem:[%s325 + $0xd0] sm:$0xff]
        %v380 = vld [vmem:[%s325 + $0xd8] sm:$0xff]
        %v381 = vld [vmem:[%s325 + $0xe0] sm:$0xff]
        %v382 = vld [vmem:[%s325 + $0xe8] sm:$0xff]
        %v383 = vld [vmem:[%s325 + $0xf0] sm:$0xff]
        %v384 = vld [vmem:[%s325 + $0xf8] sm:$0xff]
        %v385 = vpack.c.bf16 %v354, %v353
        %v386 = vpack.c.bf16 %v356, %v355
        %v387 = vpack.c.bf16 %v358, %v357
        %v388 = vpack.c.bf16 %v360, %v359
        %v389 = vpack.c.bf16 %v362, %v361
        %v390 = vpack.c.bf16 %v364, %v363
        %v391 = vpack.c.bf16 %v366, %v365
        %v392 = vpack.c.bf16 %v368, %v367
        %v393 = vpack.c.bf16 %v370, %v369
        %v394 = vpack.c.bf16 %v372, %v371
        %v395 = vpack.c.bf16 %v374, %v373
        %v396 = vpack.c.bf16 %v376, %v375
        %v397 = vpack.c.bf16 %v378, %v377
        %v398 = vpack.c.bf16 %v380, %v379
        %v399 = vpack.c.bf16 %v382, %v381
        %v400 = vpack.c.bf16 %v384, %v383
        %v401 = vld [vmem:[%s1] sm:$0xff]
        %v402 = vld [vmem:[%s1 + $0x8] sm:$0xff]
        %v403 = vld [vmem:[%s1 + $0x10] sm:$0xff]
        %v404 = vld [vmem:[%s1 + $0x18] sm:$0xff]
        %v405 = vpack.c.bf16 %v402, %v401
        %v406 = vpack.c.bf16 %v404, %v403
        %v407 = vld [vmem:[%s2] sm:$0x1]
        %v409 = vperm.slane %v407, 0
        %vm411 = vcmask 261120
        %v413 = vsel %vm411, %v385, 0
        %v416 = vsel %vm411, %v386, 0
        %v419 = vsel %vm411, %v387, 0
        %v422 = vsel %vm411, %v388, 0
        %v425 = vsel %vm411, %v389, 0
        %v428 = vsel %vm411, %v390, 0
        %v431 = vsel %vm411, %v391, 0
        %v434 = vsel %vm411, %v392, 0
        %v437 = vsel %vm411, %v393, 0
        %v440 = vsel %vm411, %v394, 0
        %v443 = vsel %vm411, %v395, 0
        %v446 = vsel %vm411, %v396, 0
        %v449 = vsel %vm411, %v397, 0
        %v452 = vsel %vm411, %v398, 0
        %v455 = vsel %vm411, %v399, 0
        %v458 = vsel %vm411, %v400, 0
        %460 = vmatpush.bf16.msra.mxu0 0
        %461 = vmatpush.bf16.msra.mxu0 0
        %462 = vmatpush.bf16.msra.mxu0 0
        %463 = vmatpush.bf16.msra.mxu0 0
        %464 = vmatpush.bf16.msra.mxu0 0
        %465 = vmatpush.bf16.msra.mxu0 0
        %466 = vmatpush.bf16.msra.mxu0 %v406
        %467 = vmatpush.bf16.msra.mxu0 %v405
        %468 = vmatmul.bf16.gmra.mxu0 %v413
        %v469 = vpop.f32.mrf.mxu0
        %v470 = vadd.f32 %v409, %v469
        %v471 = vpop.f32.mrf.mxu0
        %v472 = vadd.f32 %v409, %v471
        %473 = vmatmul.bf16.gmra.mxu0 %v416
        %v474 = vpop.f32.mrf.mxu0
        %v475 = vadd.f32 %v409, %v474
        %v476 = vpop.f32.mrf.mxu0
        %v477 = vadd.f32 %v409, %v476
        %478 = vmatmul.bf16.gmra.mxu0 %v419
        %v479 = vpop.f32.mrf.mxu0
        %v480 = vadd.f32 %v409, %v479
        %v481 = vpop.f32.mrf.mxu0
        %v482 = vadd.f32 %v409, %v481
        %483 = vmatmul.bf16.gmra.mxu0 %v422
        %v484 = vpop.f32.mrf.mxu0
        %v485 = vadd.f32 %v409, %v484
        %v486 = vpop.f32.mrf.mxu0
        %v487 = vadd.f32 %v409, %v486
        %488 = vmatmul.bf16.gmra.mxu0 %v425
        %v489 = vpop.f32.mrf.mxu0
        %v490 = vadd.f32 %v409, %v489
        %v491 = vpop.f32.mrf.mxu0
        %v492 = vadd.f32 %v409, %v491
        %493 = vmatmul.bf16.gmra.mxu0 %v428
        %v494 = vpop.f32.mrf.mxu0
        %v495 = vadd.f32 %v409, %v494
        %v496 = vpop.f32.mrf.mxu0
        %v497 = vadd.f32 %v409, %v496
        %498 = vmatmul.bf16.gmra.mxu0 %v431
        %v499 = vpop.f32.mrf.mxu0
        %v500 = vadd.f32 %v409, %v499
        %v501 = vpop.f32.mrf.mxu0
        %v502 = vadd.f32 %v409, %v501
        %503 = vmatmul.bf16.gmra.mxu0 %v434
        %v504 = vpop.f32.mrf.mxu0
        %v505 = vadd.f32 %v409, %v504
        %v506 = vpop.f32.mrf.mxu0
        %v507 = vadd.f32 %v409, %v506
        %508 = vmatmul.bf16.gmra.mxu0 %v437
        %v509 = vpop.f32.mrf.mxu0
        %v510 = vadd.f32 %v409, %v509
        %v511 = vpop.f32.mrf.mxu0
        %v512 = vadd.f32 %v409, %v511
        %513 = vmatmul.bf16.gmra.mxu0 %v440
        %v514 = vpop.f32.mrf.mxu0
        %v515 = vadd.f32 %v409, %v514
        %v516 = vpop.f32.mrf.mxu0
        %v517 = vadd.f32 %v409, %v516
        %518 = vmatmul.bf16.gmra.mxu0 %v443
        %v519 = vpop.f32.mrf.mxu0
        %v520 = vadd.f32 %v409, %v519
        %v521 = vpop.f32.mrf.mxu0
        %v522 = vadd.f32 %v409, %v521
        %523 = vmatmul.bf16.gmra.mxu0 %v446
        %v524 = vpop.f32.mrf.mxu0
        %v525 = vadd.f32 %v409, %v524
        %v526 = vpop.f32.mrf.mxu0
        %v527 = vadd.f32 %v409, %v526
        %528 = vmatmul.bf16.gmra.mxu0 %v449
        %v529 = vpop.f32.mrf.mxu0
        %v530 = vadd.f32 %v409, %v529
        %v531 = vpop.f32.mrf.mxu0
        %v532 = vadd.f32 %v409, %v531
        %533 = vmatmul.bf16.gmra.mxu0 %v452
        %v534 = vpop.f32.mrf.mxu0
        %v535 = vadd.f32 %v409, %v534
        %v536 = vpop.f32.mrf.mxu0
        %v537 = vadd.f32 %v409, %v536
        %538 = vmatmul.bf16.gmra.mxu0 %v455
        %v539 = vpop.f32.mrf.mxu0
        %v540 = vadd.f32 %v409, %v539
        %v541 = vpop.f32.mrf.mxu0
        %v542 = vadd.f32 %v409, %v541
        %543 = vmatmul.bf16.gmra.mxu0 %v458
        %v544 = vpop.f32.mrf.mxu0
        %v545 = vadd.f32 %v409, %v544
        %v546 = vpop.f32.mrf.mxu0
        %v547 = vadd.f32 %v409, %v546
        %548 = vdwg.mxu0
        %v549 = vtanh.pop %v470
        %v550 = vtanh.pop %v472
        %v551 = vtanh.pop %v475
        %v552 = vtanh.pop %v477
        %v553 = vtanh.pop %v480
        %v554 = vtanh.pop %v482
        %v555 = vtanh.pop %v485
        %v556 = vtanh.pop %v487
        %v557 = vtanh.pop %v490
        %v558 = vtanh.pop %v492
        %v559 = vtanh.pop %v495
        %v560 = vtanh.pop %v497
        %v561 = vtanh.pop %v500
        %v562 = vtanh.pop %v502
        %v563 = vtanh.pop %v505
        %v564 = vtanh.pop %v507
        %v565 = vtanh.pop %v510
        %v566 = vtanh.pop %v512
        %v567 = vtanh.pop %v515
        %v568 = vtanh.pop %v517
        %v569 = vtanh.pop %v520
        %v570 = vtanh.pop %v522
        %v571 = vtanh.pop %v525
        %v572 = vtanh.pop %v527
        %v573 = vtanh.pop %v530
        %v574 = vtanh.pop %v532
        %v575 = vtanh.pop %v535
        %v576 = vtanh.pop %v537
        %v577 = vtanh.pop %v540
        %v578 = vtanh.pop %v542
        %v579 = vtanh.pop %v545
        %v580 = vtanh.pop %v547
        %s581 = smul.u32 %s15, 64
        %v582 = vlaneseq
        %v583 = vshrl.u32 %v582, 7
        %v584 = vadd.s32 %v583, 8
        %v585 = vadd.s32 %v583, 16
        %v586 = vadd.s32 %v583, 24
        %v587 = vadd.s32 %v583, 32
        %v588 = vadd.s32 %v583, 40
        %v589 = vadd.s32 %v583, 48
        %v590 = vadd.s32 %v583, 56
        %v591 = vstv %s581
        %v592 = vadd.s32 %v591, %v583
        %v593 = vadd.s32 %v591, %v584
        %v594 = vadd.s32 %v591, %v585
        %v595 = vadd.s32 %v591, %v586
        %v596 = vadd.s32 %v591, %v587
        %v597 = vadd.s32 %v591, %v588
        %v598 = vadd.s32 %v591, %v589
        %v599 = vadd.s32 %v591, %v590
        %vm600 = vcmp.lt.s32.totalorder %v592, 200
        %vm601 = vcmp.lt.s32.totalorder %v593, 200
        %vm602 = vcmp.lt.s32.totalorder %v594, 200
        %vm603 = vcmp.lt.s32.totalorder %v595, 200
        %vm604 = vcmp.lt.s32.totalorder %v596, 200
        %vm605 = vcmp.lt.s32.totalorder %v597, 200
        %vm606 = vcmp.lt.s32.totalorder %v598, 200
        %vm607 = vcmp.lt.s32.totalorder %v599, 200
        %v608 = vsel %vm600, 1, 0
        %v609 = vsel %vm601, 1, 0
        %v610 = vsel %vm602, 1, 0
        %v611 = vsel %vm603, 1, 0
        %v612 = vsel %vm604, 1, 0
        %v613 = vsel %vm605, 1, 0
        %v614 = vsel %vm606, 1, 0
        %v615 = vsel %vm607, 1, 0
        %vm616 = vcmp.eq.s32.totalorder %v608, 1
        %vm617 = vcmp.eq.s32.totalorder %v609, 1
        %vm618 = vcmp.eq.s32.totalorder %v610, 1
        %vm619 = vcmp.eq.s32.totalorder %v611, 1
        %vm620 = vcmp.eq.s32.totalorder %v612, 1
        %vm621 = vcmp.eq.s32.totalorder %v613, 1
        %vm622 = vcmp.eq.s32.totalorder %v614, 1
        %vm623 = vcmp.eq.s32.totalorder %v615, 1
        %v624 = vsel %vm616, %v549, 0.0
        %v625 = vsel %vm617, %v550, 0.0
        %v626 = vsel %vm618, %v551, 0.0
        %v627 = vsel %vm619, %v552, 0.0
        %v628 = vsel %vm620, %v553, 0.0
        %v629 = vsel %vm621, %v554, 0.0
        %v630 = vsel %vm622, %v555, 0.0
        %v631 = vsel %vm623, %v556, 0.0
        %v632 = vld [vmem:[#allocation2] sm:$0x1]
        %vm633 = vcmask 523264
        %v634 = vsel %vm633, %v624, 0.0
        %v635 = vsel %vm633, %v625, 0.0
        %v636 = vadd.f32 %v634, %v635
        %v637 = vsel %vm633, %v626, 0.0
        %v638 = vadd.f32 %v636, %v637
        %v639 = vsel %vm633, %v627, 0.0
        %v640 = vadd.f32 %v638, %v639
        %v641 = vsel %vm633, %v628, 0.0
        %v642 = vadd.f32 %v640, %v641
        %v643 = vsel %vm633, %v629, 0.0
        %v644 = vadd.f32 %v642, %v643
        %v645 = vsel %vm633, %v630, 0.0
        %v646 = vadd.f32 %v644, %v645
        %v647 = vsel %vm633, %v631, 0.0
        %v648 = vadd.f32 %v646, %v647
        %v649 = vrot.slane %v648, 4
        %v650 = vadd.f32 %v648, %v649
        %v651 = vrot.slane %v650, 2
        %v652 = vadd.f32 %v650, %v651
        %v653 = vrot.slane %v652, 1
        %v654 = vadd.f32 %v652, %v653
        %v655 = vadd.f32 %v632, %v654
        %vm656 = vcmask 516096
        %657 = vst.msk [vmem:[#allocation2] sm:$0x1] %vm656, %v655
        %v658 = vsel %vm616, %v557, 0.0
        %v659 = vsel %vm617, %v558, 0.0
        %v660 = vsel %vm618, %v559, 0.0
        %v661 = vsel %vm619, %v560, 0.0
        %v662 = vsel %vm620, %v561, 0.0
        %v663 = vsel %vm621, %v562, 0.0
        %v664 = vsel %vm622, %v563, 0.0
        %v665 = vsel %vm623, %v564, 0.0
        %v666 = vld [vmem:[#allocation2 + $0x1] sm:$0x1]
        %v667 = vsel %vm633, %v658, 0.0
        %v668 = vsel %vm633, %v659, 0.0
        %v669 = vadd.f32 %v667, %v668
        %v670 = vsel %vm633, %v660, 0.0
        %v671 = vadd.f32 %v669, %v670
        %v672 = vsel %vm633, %v661, 0.0
        %v673 = vadd.f32 %v671, %v672
        %v674 = vsel %vm633, %v662, 0.0
        %v675 = vadd.f32 %v673, %v674
        %v676 = vsel %vm633, %v663, 0.0
        %v677 = vadd.f32 %v675, %v676
        %v678 = vsel %vm633, %v664, 0.0
        %v679 = vadd.f32 %v677, %v678
        %v680 = vsel %vm633, %v665, 0.0
        %v681 = vadd.f32 %v679, %v680
        %v682 = vrot.slane %v681, 4
        %v683 = vadd.f32 %v681, %v682
        %v684 = vrot.slane %v683, 2
        %v685 = vadd.f32 %v683, %v684
        %v686 = vrot.slane %v685, 1
        %v687 = vadd.f32 %v685, %v686
        %v688 = vadd.f32 %v666, %v687
        %689 = vst.msk [vmem:[#allocation2 + $0x1] sm:$0x1] %vm656, %v688
        %v690 = vsel %vm616, %v565, 0.0
        %v691 = vsel %vm617, %v566, 0.0
        %v692 = vsel %vm618, %v567, 0.0
        %v693 = vsel %vm619, %v568, 0.0
        %v694 = vsel %vm620, %v569, 0.0
        %v695 = vsel %vm621, %v570, 0.0
        %v696 = vsel %vm622, %v571, 0.0
        %v697 = vsel %vm623, %v572, 0.0
        %v698 = vld [vmem:[#allocation2 + $0x2] sm:$0x1]
        %v699 = vsel %vm633, %v690, 0.0
        %v700 = vsel %vm633, %v691, 0.0
        %v701 = vadd.f32 %v699, %v700
        %v702 = vsel %vm633, %v692, 0.0
        %v703 = vadd.f32 %v701, %v702
        %v704 = vsel %vm633, %v693, 0.0
        %v705 = vadd.f32 %v703, %v704
        %v706 = vsel %vm633, %v694, 0.0
        %v707 = vadd.f32 %v705, %v706
        %v708 = vsel %vm633, %v695, 0.0
        %v709 = vadd.f32 %v707, %v708
        %v710 = vsel %vm633, %v696, 0.0
        %v711 = vadd.f32 %v709, %v710
        %v712 = vsel %vm633, %v697, 0.0
        %v713 = vadd.f32 %v711, %v712
        %v714 = vrot.slane %v713, 4
        %v715 = vadd.f32 %v713, %v714
        %v716 = vrot.slane %v715, 2
        %v717 = vadd.f32 %v715, %v716
        %v718 = vrot.slane %v717, 1
        %v719 = vadd.f32 %v717, %v718
        %v720 = vadd.f32 %v698, %v719
        %721 = vst.msk [vmem:[#allocation2 + $0x2] sm:$0x1] %vm656, %v720
        %v722 = vsel %vm616, %v573, 0.0
        %v723 = vsel %vm617, %v574, 0.0
        %v724 = vsel %vm618, %v575, 0.0
        %v725 = vsel %vm619, %v576, 0.0
        %v726 = vsel %vm620, %v577, 0.0
        %v727 = vsel %vm621, %v578, 0.0
        %v728 = vsel %vm622, %v579, 0.0
        %v729 = vsel %vm623, %v580, 0.0
        %v730 = vld [vmem:[#allocation2 + $0x3] sm:$0x1]
        %v731 = vsel %vm633, %v722, 0.0
        %v732 = vsel %vm633, %v723, 0.0
        %v733 = vadd.f32 %v731, %v732
        %v734 = vsel %vm633, %v724, 0.0
        %v735 = vadd.f32 %v733, %v734
        %v736 = vsel %vm633, %v725, 0.0
        %v737 = vadd.f32 %v735, %v736
        %v738 = vsel %vm633, %v726, 0.0
        %v739 = vadd.f32 %v737, %v738
        %v740 = vsel %vm633, %v727, 0.0
        %v741 = vadd.f32 %v739, %v740
        %v742 = vsel %vm633, %v728, 0.0
        %v743 = vadd.f32 %v741, %v742
        %v744 = vsel %vm633, %v729, 0.0
        %v745 = vadd.f32 %v743, %v744
        %v746 = vrot.slane %v745, 4
        %v747 = vadd.f32 %v745, %v746
        %v748 = vrot.slane %v747, 2
        %v749 = vadd.f32 %v747, %v748
        %v750 = vrot.slane %v749, 1
        %v751 = vadd.f32 %v749, %v750
        %v752 = vadd.f32 %v730, %v751
        %753 = vst.msk [vmem:[#allocation2 + $0x3] sm:$0x1] %vm656, %v752
        %p754 = scmp.eq.s32.totalorder %s15, 3
        // Predicated region
        $region79: #{hybrid_attention.2} parent=69 // pred_check
          %p755 = pneg %p754
        $region80: #{hybrid_attention.2} parent=69 // pred_check_branch
          %757 = sbr.rel (%p755) target = $region82
        $region81: #{hybrid_attention.2} parent=69 // pred_region
          %v758 = vld [vmem:[#allocation2] sm:$0xf]
          %v759 = vmul.f32 %v758, 0.005
          %v760 = vld [vmem:[%s3] sm:$0x1]
          %v762 = vperm.slane %v760, 0
          %v764 = vmul.f32 %v759, %v762
          %vm765 = vcmask 519168
          %v766 = vsel %vm765, %v764, 0.0
          %767 = vadd.xlane.f32.xlu0 %v766
          %v768 = vpop.xlane.xlu0 %767
          %vm769 = vcmask 1043456
          %v770 = vsel %vm769, %v768, -inf
          %v771 = vrot.slane %v770, 4
          %v772 = vmax.f32 %v770, %v771
          %v773 = vrot.slane %v772, 2
          %v774 = vmax.f32 %v772, %v773
          %v775 = vrot.slane %v774, 1
          %v776 = vmax.f32 %v774, %v775
          %v777 = vsub.f32 %v768, %v776
          %v778 = vmul.f32 %v777, 1.442695
          %v779 = vpow.pop %v778
          %v780 = vsel %vm769, %v779, 0.0
          %v781 = vrot.slane %v780, 4
          %v782 = vadd.f32 %v780, %v781
          %v783 = vrot.slane %v782, 2
          %v784 = vadd.f32 %v782, %v783
          %v785 = vrot.slane %v784, 1
          %v786 = vadd.f32 %v784, %v785
          %v787 = vrcp.pop %v786
          %v788 = vmul.f32 %v786, %v787
          %v789 = vsub.f32 1.0, %v788
          %v790 = vmul.f32 %v787, %v789
          %v791 = vadd.f32 %v787, %v790
          %vm792 = vweird.f32 %v786
          %vm793 = vweird.f32 %v787
          %vm794 = vmor %vm792, %vm793
          %v795 = vsel %vm794, %v787, %v791
          %v796 = vand.u32 2147483647, %v786
          %vm797 = vcmp.eq.f32.partialorder %v796, 8.507059e+37
          %v798 = vand.u32 %v786, 2147483648
          %v799 = vor.u32 1.1754944e-38, %v798
          %v800 = vsel %vm797, %v799, %v795
          %v801 = vmul.f32 %v779, %v800
          %vm802 = vcmask 3072
          %803 = vst.msk [vmem:[%s4] sm:$0xf] %vm802, %v801
        $region82: #{hybrid_attention.2} parent=69 // pred_fallthru
          _
        // Predicated region
        $region83: #{hybrid_attention.2} parent=69 // pred_check
          %p804 = pneg %p117
        $region84: #{hybrid_attention.2} parent=69 // pred_check_branch
          %806 = sbr.rel (%p804) target = $region86
        $region85: #{hybrid_attention.2} parent=69 // pred_region
          _
        $region86: #{hybrid_attention.2} parent=69 // pred_fallthru
          _
        // Predicated region
        $region87: #{hybrid_attention.2} parent=69 // pred_check
          %p807 = pneg %p117
        $region88: #{hybrid_attention.2} parent=69 // pred_check_branch
          %809 = sbr.rel (%p807) target = $region90
        $region89: #{hybrid_attention.2} parent=69 // pred_region
          _
        $region90: #{hybrid_attention.2} parent=69 // pred_fallthru
          _
      $region70: #{hybrid_attention.2} parent=5 // pred_fallthru
        _
      %p810 = scmp.le.s32.totalorder 2, %s10
      // Predicated region
      $region91: #{hybrid_attention.2} parent=5 // pred_check
        %p811 = pneg %p810
      $region92: #{hybrid_attention.2} parent=5 // pred_check_branch
        %813 = sbr.rel (%p811) target = $region94
      $region93: #{hybrid_attention.2} parent=5 // pred_region
        %s814 = ssub.s32 %s10, 2
      $region94: #{hybrid_attention.2} parent=5 // pred_fallthru
        _
    $region6: #{hybrid_attention.2} parent=1 // loop_footer
      %s14 = sadd.s32 1, %s10
    $region7: #{hybrid_attention.2} parent=1 // loop_footer_branch
      %9 = sbr.rel target = $region3
    $region8: #{hybrid_attention.2} parent=1 // loop_exit
      _

</llo_original>
